<compile_context>
chip_gen: v5e
topology: v5e:2x2
jax: 0.10.0
libtpu: 0.0.40
codegen_flags: <defaults>
</compile_context>

<pallas_src>
import jax
import jax.numpy as jnp
from jax import lax
from jax.experimental import pallas as pl
from jax.experimental.pallas import tpu as pltpu

SELU_ALPHA = 1.6732632423543772848170429916717
SELU_SCALE = 1.0507009873554804934193349852946
BN_EPS = 1e-5


# ----------------------------- in-kernel helpers -----------------------------

def _selu(v):
    return SELU_SCALE * jnp.where(
        v > 0, v, SELU_ALPHA * (jnp.exp(jnp.minimum(v, 0.0)) - 1.0))


def cnn_kernel(x_ref, w1_ref, b1_ref, g1_ref, bt1_ref,
               w2_ref, b2_ref, g2_ref, bt2_ref, m2_ref, pool2_ref,
               w3_ref, b3_ref, g3_ref, bt3_ref, m3_ref, pool3_ref,
               hw1_ref, hb1_ref, hw2_ref, hb2_ref, oh_ref,
               out_ref):
    n_lanes = x_ref.shape[1]                        # B * (L0 // 2)

    # ---- block 1: Conv1d(1,8,1) + SELU + BN + AvgPool(2,2) -------- pure VPU ----
    xe = x_ref[0:1, :]                              # even positions (1, B*lh)
    xo = x_ref[1:2, :]                              # odd  positions (1, B*lh)
    w1 = w1_ref[...]                                # (8, 1)
    b1 = b1_ref[...]
    a1e = _selu(w1 * xe + b1)                       # (8, B*lh)
    a1o = _selu(w1 * xo + b1)
    n1 = 2.0 * n_lanes                              # BN over conv output length L0
    s1 = a1e.sum(axis=1, keepdims=True) + a1o.sum(axis=1, keepdims=True)
    q1 = (a1e * a1e).sum(axis=1, keepdims=True) + (a1o * a1o).sum(axis=1, keepdims=True)
    mean1 = s1 / n1
    var1 = q1 / n1 - mean1 * mean1
    sc1 = g1_ref[...] * lax.rsqrt(var1 + BN_EPS)
    sh1 = bt1_ref[...] - mean1 * sc1
    p1 = 0.5 * sc1 * (a1e + a1o) + sh1              # BN + AvgPool(2,2): (8, B*lh)

    # ---- block 2: Conv1d(8,16,11) as ONE batched im2col matmul -------------------
    cin2 = w1_ref.shape[0]                          # 8
    k2 = w2_ref.shape[1] // cin2                    # 11
    # pltpu.roll(x, n_lanes - k) == shift-left by k (np.roll semantics); wrapped
    # lanes only land in positions that are masked / zero-pooled below.
    taps = [p1] + [pltpu.roll(p1, shift=n_lanes - k, axis=1) for k in range(1, k2)]
    win2 = jnp.concatenate(taps, axis=0)            # (88, B*lh)
    y2 = _selu(jnp.dot(w2_ref[...], win2, preferred_element_type=jnp.float32)
               + b2_ref[...])                       # (16, B*lh)
    y2 = y2 * m2_ref[...]                           # zero invalid conv positions
    n2 = m2_ref[...].sum(axis=1, keepdims=True)     # (1,1) = B * 246
    s2 = y2.sum(axis=1, keepdims=True)
    q2 = (y2 * y2).sum(axis=1, keepdims=True)
    mean2 = s2 / n2
    var2 = q2 / n2 - mean2 * mean2
    sc2 = g2_ref[...] * lax.rsqrt(var2 + BN_EPS)
    sh2 = bt2_ref[...] - mean2 * sc2
    y2bn = y2 * sc2 + sh2
    # AvgPool(11,11) and the +1 shift needed by conv3's 2nd tap, in one matmul.
    p2b = jnp.dot(y2bn, pool2_ref[...], preferred_element_type=jnp.float32)  # (16, 2*B*22)

    # ---- block 3: Conv1d(16,32,2) + SELU + BN + AvgPool(3,3) ---------------------
    half = pool2_ref.shape[1] // 2
    win3 = jnp.concatenate([p2b[:, :half], p2b[:, half:]], axis=0)           # (32, B*22)
    y3 = _selu(jnp.dot(w3_ref[...], win3, preferred_element_type=jnp.float32)
               + b3_ref[...])                       # (32, B*22)
    y3 = y3 * m3_ref[...]
    n3 = m3_ref[...].sum(axis=1, keepdims=True)     # (1,1) = B * 21
    s3 = y3.sum(axis=1, keepdims=True)
    q3 = (y3 * y3).sum(axis=1, keepdims=True)
    mean3 = s3 / n3
    var3 = q3 / n3 - mean3 * mean3
    sc3 = g3_ref[...] * lax.rsqrt(var3 + BN_EPS)
    sh3 = bt3_ref[...] - mean3 * sc3
    y3bn = y3 * sc3 + sh3
    p3 = jnp.dot(y3bn, pool3_ref[...], preferred_element_type=jnp.float32)   # (32, 7*B)

    # ---- flatten in-register (no VMEM scratch, no narrow stores) + fused heads ---
    cf = p3.shape[0]                                # 32
    lf = hw1_ref.shape[0] // cf                     # 7
    bsz = p3.shape[1] // lf                         # B
    p3t = p3.T                                      # (7*B, 32), rows ordered pos*B + b
    flat = jnp.concatenate(
        [p3t[j * bsz:(j + 1) * bsz, :] for j in range(lf)], axis=1)          # (B, 224)
    z = jnp.dot(flat, hw1_ref[...], preferred_element_type=jnp.float32) + hb1_ref[...]
    z2 = jnp.dot(z, hw2_ref[...], preferred_element_type=jnp.float32) + hb2_ref[...]

    # ---- per-head Softmax(dim=1), vectorized; ONE lane-dense (B, H*K) store -------
    oh = oh_ref[...]                                                         # (H, K*H)
    masked = jnp.where(oh[None, :, :] > 0.5, z2[:, None, :], -jnp.inf)       # (B, H, KH)
    m = masked.max(axis=2)                                                   # (B, H)
    m_full = (m[:, :, None] * oh[None, :, :]).sum(axis=1)                    # (B, KH)
    e = jnp.exp(z2 - m_full)
    s = (e[:, None, :] * oh[None, :, :]).sum(axis=2)                         # (B, H)
    s_full = (s[:, :, None] * oh[None, :, :]).sum(axis=1)                    # (B, KH)
    out_ref[...] = e / s_full


# ------------------------------ host-side glue -------------------------------

def feature_dims(l0):
    lh = l0 // 2          # after AvgPool(2,2)
    l2 = lh - 10          # Conv1d(8,16,11)
    p2 = l2 // 11         # AvgPool(11,11)
    l3 = p2 - 1           # Conv1d(16,32,2)
    p3 = l3 // 3          # AvgPool(3,3)
    return lh, l2, p2, l3, p3


def make_params(key, num_sub_heads, output_k, l0):
    _, _, _, _, p3 = feature_dims(l0)
    flat = 32 * p3
    keys = jax.random.split(key, 6 + 4 * num_sub_heads)

    def nrm(k, shape, fan_in):
        return (jax.random.normal(k, shape, jnp.float32) /
                jnp.sqrt(jnp.float32(fan_in)))

    params = {
        'conv1_w': nrm(keys[0], (8, 1, 1), 1), 'conv1_b': nrm(keys[1], (8,), 1),
        'bn1_g': jnp.ones((8,), jnp.float32), 'bn1_b': jnp.zeros((8,), jnp.float32),
        'conv2_w': nrm(keys[2], (16, 8, 11), 88), 'conv2_b': nrm(keys[3], (16,), 88),
        'bn2_g': jnp.ones((16,), jnp.float32), 'bn2_b': jnp.zeros((16,), jnp.float32),
        'conv3_w': nrm(keys[4], (32, 16, 2), 32), 'conv3_b': nrm(keys[5], (32,), 32),
        'bn3_g': jnp.ones((32,), jnp.float32), 'bn3_b': jnp.zeros((32,), jnp.float32),
        'heads': [],
    }
    hk = keys[6:]
    for h in range(num_sub_heads):
        k1, k2, k3, k4 = hk[4 * h:4 * h + 4]
        params['heads'].append((
            nrm(k1, (20, flat), flat), nrm(k2, (20,), flat),
            nrm(k3, (output_k, 20), 20), nrm(k4, (output_k,), 20),
        ))
    return params


def prepare_inputs(params, batch, l0):
    """Host-side weight repacking / pool-matrix construction (done ONCE per params)."""
    lh, l2, p2n, l3, p3n = feature_dims(l0)
    f32 = jnp.float32
    col = lambda v: v.reshape(-1, 1).astype(f32)

    w1 = params['conv1_w'].reshape(8, 1).astype(f32)
    # im2col conv weights, row order tap-major / channel-minor (k*Cin + c)
    w2k = jnp.transpose(params['conv2_w'], (0, 2, 1)).reshape(16, 8 * 11).astype(f32)
    w3k = jnp.transpose(params['conv3_w'], (0, 2, 1)).reshape(32, 16 * 2).astype(f32)

    # validity masks over the batch*position lane axis
    mask2 = ((jnp.arange(batch * lh) % lh) < l2).astype(f32).reshape(1, batch * lh)
    mask3 = ((jnp.arange(batch * p2n) % p2n) < l3).astype(f32).reshape(1, batch * p2n)

    # AvgPool(11,11) block-diagonal matrix; second half also applies the +1 position
    # shift needed by Conv1d(16,32,2)'s second tap (so block 3 needs no lane roll).
    r2 = jnp.arange(batch * lh)
    rb2, rp2 = r2 // lh, r2 % lh
    c2 = jnp.arange(batch * p2n)
    cb2, cj2 = c2 // p2n, c2 % p2n
    same_b2 = rb2[:, None] == cb2[None, :]
    in_rng2 = (rp2[:, None] < 11 * p2n)
    pool2 = jnp.where(same_b2 & in_rng2 & (rp2[:, None] // 11 == cj2[None, :]),
                      1.0 / 11, 0.0)
    pool2s = jnp.where(same_b2 & in_rng2 & (rp2[:, None] // 11 == cj2[None, :] + 1),
                       1.0 / 11, 0.0)
    pool2both = jnp.concatenate([pool2, pool2s], axis=1).astype(f32)   # (B*lh, 2*B*22)

    # AvgPool(3,3) matrix; columns ordered position-major (j*B + b) so the transposed
    # result lane-concatenates directly into the flattened feature rows.
    r3 = jnp.arange(batch * p2n)
    rb3, rl3 = r3 // p2n, r3 % p2n
    c3 = jnp.arange(batch * p3n)
    cj3, cb3 = c3 // batch, c3 % batch
    pool3 = jnp.where((rb3[:, None] == cb3[None, :]) & (rl3[:, None] < 3 * p3n)
                      & (rl3[:, None] // 3 == cj3[None, :]), 1.0 / 3, 0.0).astype(f32)

    flat = 32 * p3n
    hid = params['heads'][0][0].shape[0]
    K = params['heads'][0][2].shape[0]
    H = len(params['heads'])

    hw1_cols, hb1_cols, hb2_cols = [], [], []
    hw2_all = jnp.zeros((hid * H, K * H), f32)
    for h, (W1, bh1, W2, bh2) in enumerate(params['heads']):
        # kernel flat order is position-major (j*32 + c); PyTorch flatten is c*Lf + j.
        w1h = jnp.transpose(W1.reshape(hid, 32, p3n), (2, 1, 0)).reshape(flat, hid)
        hw1_cols.append(w1h)
        hb1_cols.append(bh1.reshape(1, hid))
        hw2_all = hw2_all.at[h * hid:(h + 1) * hid, h * K:(h + 1) * K].set(W2.T)
        hb2_cols.append(bh2.reshape(1, K))
    hw1_all = jnp.concatenate(hw1_cols, axis=1).astype(f32)            # (flat, 20H)
    hb1_all = jnp.concatenate(hb1_cols, axis=1).astype(f32)            # (1, 20H)
    hb2_all = jnp.concatenate(hb2_cols, axis=1).astype(f32)            # (1, K*H)
    onehot = (jnp.arange(K * H)[None, :] // K ==
              jnp.arange(H)[:, None]).astype(f32)                      # (H, K*H)

    return (w1, col(params['conv1_b']), col(params['bn1_g']), col(params['bn1_b']),
            w2k, col(params['conv2_b']), col(params['bn2_g']), col(params['bn2_b']),
            mask2, pool2both,
            w3k, col(params['conv3_b']), col(params['bn3_g']), col(params['bn3_b']),
            mask3, pool3,
            hw1_all, hb1_all, hw2_all, hb2_all, onehot)


@jax.jit
def _forward_impl(x, prep):
    B, l0 = x.shape
    lh = l0 // 2
    # even/odd split -> AvgPool(2,2) becomes a mean over two sublane rows in-kernel
    x_eo = (jnp.transpose(x.reshape(B, lh, 2), (2, 0, 1))
            .reshape(2, B * lh).astype(jnp.float32))
    ins = (x_eo,) + tuple(prep)
    kh = prep[-1].shape[1]                     # num_sub_heads * output_k
    return pl.pallas_call(
        cnn_kernel,
        out_shape=jax.ShapeDtypeStruct((B, kh), jnp.float32),
        in_specs=[pl.BlockSpec(memory_space=pltpu.MemorySpace.VMEM) for _ in ins],
        out_specs=pl.BlockSpec(memory_space=pltpu.MemorySpace.VMEM),
    )(*ins)


def cnn_forward(x, prep, num_sub_heads, output_k):
    out = _forward_impl(x, prep)
    return [out[:, h * output_k:(h + 1) * output_k] for h in range(num_sub_heads)]


# --------------------------- independent JAX reference ---------------------------

def ref_forward(x, params, num_sub_heads, output_k):
    B, l0 = x.shape
    h = x.reshape(B, 1, l0)

    def conv(h, w, b):
        out = lax.conv_general_dilated(h, w, (1,), 'VALID',
                                       dimension_numbers=('NCH', 'OIH', 'NCH'))
        return out + b[None, :, None]

    def selu(v):
        return SELU_SCALE * jnp.where(
            v > 0, v, SELU_ALPHA * (jnp.exp(jnp.minimum(v, 0.0)) - 1.0))

    def bn(h, g, bt):
        mean = jnp.mean(h, axis=(0, 2), keepdims=True)
        var = jnp.mean((h - mean) ** 2, axis=(0, 2), keepdims=True)
        return (h - mean) / jnp.sqrt(var + BN_EPS) * g[None, :, None] + bt[None, :, None]

    def pool(h, p):
        lout = h.shape[2] // p
        return h[:, :, :lout * p].reshape(h.shape[0], h.shape[1], lout, p).mean(axis=3)

    h = pool(bn(selu(conv(h, params['conv1_w'], params['conv1_b'])),
                params['bn1_g'], params['bn1_b']), 2)
    h = pool(bn(selu(conv(h, params['conv2_w'], params['conv2_b'])),
                params['bn2_g'], params['bn2_b']), 11)
    h = pool(bn(selu(conv(h, params['conv3_w'], params['conv3_b'])),
                params['bn3_g'], params['bn3_b']), 3)
    feat = h.reshape(B, -1)
    outs = []
    for (W1, b1, W2, b2) in params['heads']:
        z = feat @ W1.T + b1
        z2 = z @ W2.T + b2
        outs.append(jax.nn.softmax(z2, axis=1))
    return outs


if __name__ == "__main__":
    NUM_SUB_HEADS = 2   # undefined global in the original file; chosen here
    OUTPUT_K = 10       # undefined global in the original file; chosen here
    B, L0 = 2, 512      # L0=512 -> feature length 7 -> flatten 32*7 = 224

    key = jax.random.PRNGKey(0)
    kx, kp = jax.random.split(key)
    x = jax.random.normal(kx, (B, L0), jnp.float32)
    params = make_params(kp, NUM_SUB_HEADS, OUTPUT_K, L0)
    prep = prepare_inputs(params, B, L0)   # hoisted out of the per-call path

    outs = cnn_forward(x, prep, NUM_SUB_HEADS, OUTPUT_K)
    outs = jax.block_until_ready(outs)

    refs = ref_forward(x, params, NUM_SUB_HEADS, OUTPUT_K)
    for o, r in zip(outs, refs):
        assert o.shape == (B, OUTPUT_K)
        assert bool(jnp.all(jnp.isfinite(o)))
        assert bool(jnp.allclose(jnp.sum(o, axis=1), 1.0, atol=1e-4))
        assert bool(jnp.allclose(o, r, atol=5e-2))
    print("KERNEL_OK")
</pallas_src>

<mosaic_0001>
module attributes {stable_mosaic.version = 11 : i64} {
  func.func @cnn_kernel(%arg0: memref<2x512xf32, #tpu.memory_space<vmem>>, %arg1: memref<8x1xf32, #tpu.memory_space<vmem>>, %arg2: memref<8x1xf32, #tpu.memory_space<vmem>>, %arg3: memref<8x1xf32, #tpu.memory_space<vmem>>, %arg4: memref<8x1xf32, #tpu.memory_space<vmem>>, %arg5: memref<16x88xf32, #tpu.memory_space<vmem>>, %arg6: memref<16x1xf32, #tpu.memory_space<vmem>>, %arg7: memref<16x1xf32, #tpu.memory_space<vmem>>, %arg8: memref<16x1xf32, #tpu.memory_space<vmem>>, %arg9: memref<1x512xf32, #tpu.memory_space<vmem>>, %arg10: memref<512x88xf32, #tpu.memory_space<vmem>>, %arg11: memref<32x32xf32, #tpu.memory_space<vmem>>, %arg12: memref<32x1xf32, #tpu.memory_space<vmem>>, %arg13: memref<32x1xf32, #tpu.memory_space<vmem>>, %arg14: memref<32x1xf32, #tpu.memory_space<vmem>>, %arg15: memref<1x44xf32, #tpu.memory_space<vmem>>, %arg16: memref<44x14xf32, #tpu.memory_space<vmem>>, %arg17: memref<224x40xf32, #tpu.memory_space<vmem>>, %arg18: memref<1x40xf32, #tpu.memory_space<vmem>>, %arg19: memref<40x20xf32, #tpu.memory_space<vmem>>, %arg20: memref<1x20xf32, #tpu.memory_space<vmem>>, %arg21: memref<2x20xf32, #tpu.memory_space<vmem>>, %arg22: memref<2x20xf32, #tpu.memory_space<vmem>>) attributes {dimension_semantics = [], scalar_prefetch = 0 : i64, scratch_operands = 0 : i64, tpu.core_type = #tpu.core_type<tc>} {
    %c0 = arith.constant 0 : index
    %c0_0 = arith.constant 0 : index
    %0 = vector.load %arg0[%c0, %c0_0] : memref<2x512xf32, #tpu.memory_space<vmem>>, vector<1x512xf32>
    %c1 = arith.constant 1 : index
    %c0_1 = arith.constant 0 : index
    %1 = vector.load %arg0[%c1, %c0_1] : memref<2x512xf32, #tpu.memory_space<vmem>>, vector<1x512xf32>
    %c0_2 = arith.constant 0 : index
    %c0_3 = arith.constant 0 : index
    %2 = vector.load %arg1[%c0_2, %c0_3] : memref<8x1xf32, #tpu.memory_space<vmem>>, vector<8x1xf32>
    %c0_4 = arith.constant 0 : index
    %c0_5 = arith.constant 0 : index
    %3 = vector.load %arg2[%c0_4, %c0_5] : memref<8x1xf32, #tpu.memory_space<vmem>>, vector<8x1xf32>
    %4 = vector.broadcast %2 : vector<8x1xf32> to vector<8x512xf32>
    %5 = vector.broadcast %0 : vector<1x512xf32> to vector<8x512xf32>
    %6 = arith.mulf %4, %5 : vector<8x512xf32>
    %7 = vector.broadcast %3 : vector<8x1xf32> to vector<8x512xf32>
    %8 = arith.addf %6, %7 : vector<8x512xf32>
    %cst = arith.constant 0.000000e+00 : f32
    %9 = vector.broadcast %cst : f32 to vector<8x512xf32>
    %10 = arith.cmpf ogt, %8, %9 : vector<8x512xf32>
    %cst_6 = arith.constant 0.000000e+00 : f32
    %11 = vector.broadcast %cst_6 : f32 to vector<8x512xf32>
    %12 = arith.minimumf %8, %11 : vector<8x512xf32>
    %13 = math.exp %12 : vector<8x512xf32>
    %cst_7 = arith.constant 1.000000e+00 : f32
    %14 = vector.broadcast %cst_7 : f32 to vector<8x512xf32>
    %15 = arith.subf %13, %14 : vector<8x512xf32>
    %cst_8 = arith.constant 1.67326319 : f32
    %16 = vector.broadcast %cst_8 : f32 to vector<8x512xf32>
    %17 = arith.mulf %16, %15 : vector<8x512xf32>
    %18 = arith.select %10, %8, %17 : vector<8x512xi1>, vector<8x512xf32>
    %cst_9 = arith.constant 1.05070102 : f32
    %19 = vector.broadcast %cst_9 : f32 to vector<8x512xf32>
    %20 = arith.mulf %19, %18 : vector<8x512xf32>
    %21 = vector.broadcast %2 : vector<8x1xf32> to vector<8x512xf32>
    %22 = vector.broadcast %1 : vector<1x512xf32> to vector<8x512xf32>
    %23 = arith.mulf %21, %22 : vector<8x512xf32>
    %24 = vector.broadcast %3 : vector<8x1xf32> to vector<8x512xf32>
    %25 = arith.addf %23, %24 : vector<8x512xf32>
    %cst_10 = arith.constant 0.000000e+00 : f32
    %26 = vector.broadcast %cst_10 : f32 to vector<8x512xf32>
    %27 = arith.cmpf ogt, %25, %26 : vector<8x512xf32>
    %cst_11 = arith.constant 0.000000e+00 : f32
    %28 = vector.broadcast %cst_11 : f32 to vector<8x512xf32>
    %29 = arith.minimumf %25, %28 : vector<8x512xf32>
    %30 = math.exp %29 : vector<8x512xf32>
    %cst_12 = arith.constant 1.000000e+00 : f32
    %31 = vector.broadcast %cst_12 : f32 to vector<8x512xf32>
    %32 = arith.subf %30, %31 : vector<8x512xf32>
    %cst_13 = arith.constant 1.67326319 : f32
    %33 = vector.broadcast %cst_13 : f32 to vector<8x512xf32>
    %34 = arith.mulf %33, %32 : vector<8x512xf32>
    %35 = arith.select %27, %25, %34 : vector<8x512xi1>, vector<8x512xf32>
    %cst_14 = arith.constant 1.05070102 : f32
    %36 = vector.broadcast %cst_14 : f32 to vector<8x512xf32>
    %37 = arith.mulf %36, %35 : vector<8x512xf32>
    %cst_15 = arith.constant dense<0.000000e+00> : vector<8xf32>
    %38 = vector.multi_reduction <add>, %20, %cst_15 [1] : vector<8x512xf32> to vector<8xf32>
    %39 = vector.shape_cast %38 : vector<8xf32> to vector<8x1xf32>
    %cst_16 = arith.constant dense<0.000000e+00> : vector<8xf32>
    %40 = vector.multi_reduction <add>, %37, %cst_16 [1] : vector<8x512xf32> to vector<8xf32>
    %41 = vector.shape_cast %40 : vector<8xf32> to vector<8x1xf32>
    %42 = arith.addf %39, %41 : vector<8x1xf32>
    %43 = arith.mulf %20, %20 : vector<8x512xf32>
    %cst_17 = arith.constant dense<0.000000e+00> : vector<8xf32>
    %44 = vector.multi_reduction <add>, %43, %cst_17 [1] : vector<8x512xf32> to vector<8xf32>
    %45 = vector.shape_cast %44 : vector<8xf32> to vector<8x1xf32>
    %46 = arith.mulf %37, %37 : vector<8x512xf32>
    %cst_18 = arith.constant dense<0.000000e+00> : vector<8xf32>
    %47 = vector.multi_reduction <add>, %46, %cst_18 [1] : vector<8x512xf32> to vector<8xf32>
    %48 = vector.shape_cast %47 : vector<8xf32> to vector<8x1xf32>
    %49 = arith.addf %45, %48 : vector<8x1xf32>
    %cst_19 = arith.constant 1.024000e+03 : f32
    %50 = vector.broadcast %cst_19 : f32 to vector<8x1xf32>
    %51 = arith.divf %42, %50 : vector<8x1xf32>
    %cst_20 = arith.constant 1.024000e+03 : f32
    %52 = vector.broadcast %cst_20 : f32 to vector<8x1xf32>
    %53 = arith.divf %49, %52 : vector<8x1xf32>
    %54 = arith.mulf %51, %51 : vector<8x1xf32>
    %55 = arith.subf %53, %54 : vector<8x1xf32>
    %c0_21 = arith.constant 0 : index
    %c0_22 = arith.constant 0 : index
    %56 = vector.load %arg3[%c0_21, %c0_22] : memref<8x1xf32, #tpu.memory_space<vmem>>, vector<8x1xf32>
    %cst_23 = arith.constant 9.99999974E-6 : f32
    %57 = vector.broadcast %cst_23 : f32 to vector<8x1xf32>
    %58 = arith.addf %55, %57 : vector<8x1xf32>
    %59 = math.rsqrt %58 : vector<8x1xf32>
    %60 = arith.mulf %56, %59 : vector<8x1xf32>
    %c0_24 = arith.constant 0 : index
    %c0_25 = arith.constant 0 : index
    %61 = vector.load %arg4[%c0_24, %c0_25] : memref<8x1xf32, #tpu.memory_space<vmem>>, vector<8x1xf32>
    %62 = arith.mulf %51, %60 : vector<8x1xf32>
    %63 = arith.subf %61, %62 : vector<8x1xf32>
    %cst_26 = arith.constant 5.000000e-01 : f32
    %64 = vector.broadcast %cst_26 : f32 to vector<8x1xf32>
    %65 = arith.mulf %64, %60 : vector<8x1xf32>
    %66 = arith.addf %20, %37 : vector<8x512xf32>
    %67 = vector.broadcast %65 : vector<8x1xf32> to vector<8x512xf32>
    %68 = arith.mulf %67, %66 : vector<8x512xf32>
    %69 = vector.broadcast %63 : vector<8x1xf32> to vector<8x512xf32>
    %70 = arith.addf %68, %69 : vector<8x512xf32>
    %c511_i32 = arith.constant 511 : i32
    %71 = tpu.dynamic_rotate %70 by %c511_i32 dim 1 : vector<8x512xf32>, i32 -> vector<8x512xf32>
    %c510_i32 = arith.constant 510 : i32
    %72 = tpu.dynamic_rotate %70 by %c510_i32 dim 1 : vector<8x512xf32>, i32 -> vector<8x512xf32>
    %c509_i32 = arith.constant 509 : i32
    %73 = tpu.dynamic_rotate %70 by %c509_i32 dim 1 : vector<8x512xf32>, i32 -> vector<8x512xf32>
    %c508_i32 = arith.constant 508 : i32
    %74 = tpu.dynamic_rotate %70 by %c508_i32 dim 1 : vector<8x512xf32>, i32 -> vector<8x512xf32>
    %c507_i32 = arith.constant 507 : i32
    %75 = tpu.dynamic_rotate %70 by %c507_i32 dim 1 : vector<8x512xf32>, i32 -> vector<8x512xf32>
    %c506_i32 = arith.constant 506 : i32
    %76 = tpu.dynamic_rotate %70 by %c506_i32 dim 1 : vector<8x512xf32>, i32 -> vector<8x512xf32>
    %c505_i32 = arith.constant 505 : i32
    %77 = tpu.dynamic_rotate %70 by %c505_i32 dim 1 : vector<8x512xf32>, i32 -> vector<8x512xf32>
    %c504_i32 = arith.constant 504 : i32
    %78 = tpu.dynamic_rotate %70 by %c504_i32 dim 1 : vector<8x512xf32>, i32 -> vector<8x512xf32>
    %c503_i32 = arith.constant 503 : i32
    %79 = tpu.dynamic_rotate %70 by %c503_i32 dim 1 : vector<8x512xf32>, i32 -> vector<8x512xf32>
    %c502_i32 = arith.constant 502 : i32
    %80 = tpu.dynamic_rotate %70 by %c502_i32 dim 1 : vector<8x512xf32>, i32 -> vector<8x512xf32>
    %81 = tpu.concatenate %70, %71, %72, %73, %74, %75, %76, %77, %78, %79, %80 in 0 : vector<8x512xf32>, vector<8x512xf32>, vector<8x512xf32>, vector<8x512xf32>, vector<8x512xf32>, vector<8x512xf32>, vector<8x512xf32>, vector<8x512xf32>, vector<8x512xf32>, vector<8x512xf32>, vector<8x512xf32> -> vector<88x512xf32>
    %c0_27 = arith.constant 0 : index
    %c0_28 = arith.constant 0 : index
    %82 = vector.load %arg5[%c0_27, %c0_28] : memref<16x88xf32, #tpu.memory_space<vmem>>, vector<16x88xf32>
    %cst_29 = arith.constant dense<0.000000e+00> : vector<16x512xf32>
    %83 = tpu.matmul %82, %81, %cst_29 {dimension_numbers = #tpu.dot_dimension_numbers<[1], [0], [0], [1], [0, 0, 1, 1], [], []>} : vector<16x88xf32>, vector<88x512xf32>, vector<16x512xf32> -> vector<16x512xf32>
    %c0_30 = arith.constant 0 : index
    %c0_31 = arith.constant 0 : index
    %84 = vector.load %arg6[%c0_30, %c0_31] : memref<16x1xf32, #tpu.memory_space<vmem>>, vector<16x1xf32>
    %85 = vector.broadcast %84 : vector<16x1xf32> to vector<16x512xf32>
    %86 = arith.addf %83, %85 : vector<16x512xf32>
    %cst_32 = arith.constant 0.000000e+00 : f32
    %87 = vector.broadcast %cst_32 : f32 to vector<16x512xf32>
    %88 = arith.cmpf ogt, %86, %87 : vector<16x512xf32>
    %cst_33 = arith.constant 0.000000e+00 : f32
    %89 = vector.broadcast %cst_33 : f32 to vector<16x512xf32>
    %90 = arith.minimumf %86, %89 : vector<16x512xf32>
    %91 = math.exp %90 : vector<16x512xf32>
    %cst_34 = arith.constant 1.000000e+00 : f32
    %92 = vector.broadcast %cst_34 : f32 to vector<16x512xf32>
    %93 = arith.subf %91, %92 : vector<16x512xf32>
    %cst_35 = arith.constant 1.67326319 : f32
    %94 = vector.broadcast %cst_35 : f32 to vector<16x512xf32>
    %95 = arith.mulf %94, %93 : vector<16x512xf32>
    %96 = arith.select %88, %86, %95 : vector<16x512xi1>, vector<16x512xf32>
    %cst_36 = arith.constant 1.05070102 : f32
    %97 = vector.broadcast %cst_36 : f32 to vector<16x512xf32>
    %98 = arith.mulf %97, %96 : vector<16x512xf32>
    %c0_37 = arith.constant 0 : index
    %c0_38 = arith.constant 0 : index
    %99 = vector.load %arg9[%c0_37, %c0_38] : memref<1x512xf32, #tpu.memory_space<vmem>>, vector<1x512xf32>
    %100 = vector.broadcast %99 : vector<1x512xf32> to vector<16x512xf32>
    %101 = arith.mulf %98, %100 : vector<16x512xf32>
    %c0_39 = arith.constant 0 : index
    %c0_40 = arith.constant 0 : index
    %102 = vector.load %arg9[%c0_39, %c0_40] : memref<1x512xf32, #tpu.memory_space<vmem>>, vector<1x512xf32>
    %cst_41 = arith.constant dense<0.000000e+00> : vector<1xf32>
    %103 = vector.multi_reduction <add>, %102, %cst_41 [1] : vector<1x512xf32> to vector<1xf32>
    %104 = vector.shape_cast %103 : vector<1xf32> to vector<1x1xf32>
    %cst_42 = arith.constant dense<0.000000e+00> : vector<16xf32>
    %105 = vector.multi_reduction <add>, %101, %cst_42 [1] : vector<16x512xf32> to vector<16xf32>
    %106 = vector.shape_cast %105 : vector<16xf32> to vector<16x1xf32>
    %107 = arith.mulf %101, %101 : vector<16x512xf32>
    %cst_43 = arith.constant dense<0.000000e+00> : vector<16xf32>
    %108 = vector.multi_reduction <add>, %107, %cst_43 [1] : vector<16x512xf32> to vector<16xf32>
    %109 = vector.shape_cast %108 : vector<16xf32> to vector<16x1xf32>
    %110 = vector.broadcast %104 : vector<1x1xf32> to vector<16x1xf32>
    %111 = arith.divf %106, %110 : vector<16x1xf32>
    %112 = vector.broadcast %104 : vector<1x1xf32> to vector<16x1xf32>
    %113 = arith.divf %109, %112 : vector<16x1xf32>
    %114 = arith.mulf %111, %111 : vector<16x1xf32>
    %115 = arith.subf %113, %114 : vector<16x1xf32>
    %c0_44 = arith.constant 0 : index
    %c0_45 = arith.constant 0 : index
    %116 = vector.load %arg7[%c0_44, %c0_45] : memref<16x1xf32, #tpu.memory_space<vmem>>, vector<16x1xf32>
    %cst_46 = arith.constant 9.99999974E-6 : f32
    %117 = vector.broadcast %cst_46 : f32 to vector<16x1xf32>
    %118 = arith.addf %115, %117 : vector<16x1xf32>
    %119 = math.rsqrt %118 : vector<16x1xf32>
    %120 = arith.mulf %116, %119 : vector<16x1xf32>
    %c0_47 = arith.constant 0 : index
    %c0_48 = arith.constant 0 : index
    %121 = vector.load %arg8[%c0_47, %c0_48] : memref<16x1xf32, #tpu.memory_space<vmem>>, vector<16x1xf32>
    %122 = arith.mulf %111, %120 : vector<16x1xf32>
    %123 = arith.subf %121, %122 : vector<16x1xf32>
    %124 = vector.broadcast %120 : vector<16x1xf32> to vector<16x512xf32>
    %125 = arith.mulf %101, %124 : vector<16x512xf32>
    %126 = vector.broadcast %123 : vector<16x1xf32> to vector<16x512xf32>
    %127 = arith.addf %125, %126 : vector<16x512xf32>
    %c0_49 = arith.constant 0 : index
    %c0_50 = arith.constant 0 : index
    %128 = vector.load %arg10[%c0_49, %c0_50] : memref<512x88xf32, #tpu.memory_space<vmem>>, vector<512x88xf32>
    %cst_51 = arith.constant dense<0.000000e+00> : vector<16x88xf32>
    %129 = tpu.matmul %127, %128, %cst_51 {dimension_numbers = #tpu.dot_dimension_numbers<[1], [0], [0], [1], [0, 0, 1, 1], [], []>} : vector<16x512xf32>, vector<512x88xf32>, vector<16x88xf32> -> vector<16x88xf32>
    %130 = vector.extract_strided_slice %129 {offsets = [0, 0], sizes = [16, 44], strides = [1, 1]} : vector<16x88xf32> to vector<16x44xf32>
    %131 = vector.extract_strided_slice %129 {offsets = [0, 44], sizes = [16, 44], strides = [1, 1]} : vector<16x88xf32> to vector<16x44xf32>
    %132 = tpu.concatenate %130, %131 in 0 : vector<16x44xf32>, vector<16x44xf32> -> vector<32x44xf32>
    %c0_52 = arith.constant 0 : index
    %c0_53 = arith.constant 0 : index
    %133 = vector.load %arg11[%c0_52, %c0_53] : memref<32x32xf32, #tpu.memory_space<vmem>>, vector<32x32xf32>
    %cst_54 = arith.constant dense<0.000000e+00> : vector<32x44xf32>
    %134 = tpu.matmul %133, %132, %cst_54 {dimension_numbers = #tpu.dot_dimension_numbers<[1], [0], [0], [1], [0, 0, 1, 1], [], []>} : vector<32x32xf32>, vector<32x44xf32>, vector<32x44xf32> -> vector<32x44xf32>
    %c0_55 = arith.constant 0 : index
    %c0_56 = arith.constant 0 : index
    %135 = vector.load %arg12[%c0_55, %c0_56] : memref<32x1xf32, #tpu.memory_space<vmem>>, vector<32x1xf32>
    %136 = vector.broadcast %135 : vector<32x1xf32> to vector<32x44xf32>
    %137 = arith.addf %134, %136 : vector<32x44xf32>
    %cst_57 = arith.constant 0.000000e+00 : f32
    %138 = vector.broadcast %cst_57 : f32 to vector<32x44xf32>
    %139 = arith.cmpf ogt, %137, %138 : vector<32x44xf32>
    %cst_58 = arith.constant 0.000000e+00 : f32
    %140 = vector.broadcast %cst_58 : f32 to vector<32x44xf32>
    %141 = arith.minimumf %137, %140 : vector<32x44xf32>
    %142 = math.exp %141 : vector<32x44xf32>
    %cst_59 = arith.constant 1.000000e+00 : f32
    %143 = vector.broadcast %cst_59 : f32 to vector<32x44xf32>
    %144 = arith.subf %142, %143 : vector<32x44xf32>
    %cst_60 = arith.constant 1.67326319 : f32
    %145 = vector.broadcast %cst_60 : f32 to vector<32x44xf32>
    %146 = arith.mulf %145, %144 : vector<32x44xf32>
    %147 = arith.select %139, %137, %146 : vector<32x44xi1>, vector<32x44xf32>
    %cst_61 = arith.constant 1.05070102 : f32
    %148 = vector.broadcast %cst_61 : f32 to vector<32x44xf32>
    %149 = arith.mulf %148, %147 : vector<32x44xf32>
    %c0_62 = arith.constant 0 : index
    %c0_63 = arith.constant 0 : index
    %150 = vector.load %arg15[%c0_62, %c0_63] : memref<1x44xf32, #tpu.memory_space<vmem>>, vector<1x44xf32>
    %151 = vector.broadcast %150 : vector<1x44xf32> to vector<32x44xf32>
    %152 = arith.mulf %149, %151 : vector<32x44xf32>
    %c0_64 = arith.constant 0 : index
    %c0_65 = arith.constant 0 : index
    %153 = vector.load %arg15[%c0_64, %c0_65] : memref<1x44xf32, #tpu.memory_space<vmem>>, vector<1x44xf32>
    %cst_66 = arith.constant dense<0.000000e+00> : vector<1xf32>
    %154 = vector.multi_reduction <add>, %153, %cst_66 [1] : vector<1x44xf32> to vector<1xf32>
    %155 = vector.shape_cast %154 : vector<1xf32> to vector<1x1xf32>
    %cst_67 = arith.constant dense<0.000000e+00> : vector<32xf32>
    %156 = vector.multi_reduction <add>, %152, %cst_67 [1] : vector<32x44xf32> to vector<32xf32>
    %157 = vector.shape_cast %156 : vector<32xf32> to vector<32x1xf32>
    %158 = arith.mulf %152, %152 : vector<32x44xf32>
    %cst_68 = arith.constant dense<0.000000e+00> : vector<32xf32>
    %159 = vector.multi_reduction <add>, %158, %cst_68 [1] : vector<32x44xf32> to vector<32xf32>
    %160 = vector.shape_cast %159 : vector<32xf32> to vector<32x1xf32>
    %161 = vector.broadcast %155 : vector<1x1xf32> to vector<32x1xf32>
    %162 = arith.divf %157, %161 : vector<32x1xf32>
    %163 = vector.broadcast %155 : vector<1x1xf32> to vector<32x1xf32>
    %164 = arith.divf %160, %163 : vector<32x1xf32>
    %165 = arith.mulf %162, %162 : vector<32x1xf32>
    %166 = arith.subf %164, %165 : vector<32x1xf32>
    %c0_69 = arith.constant 0 : index
    %c0_70 = arith.constant 0 : index
    %167 = vector.load %arg13[%c0_69, %c0_70] : memref<32x1xf32, #tpu.memory_space<vmem>>, vector<32x1xf32>
    %cst_71 = arith.constant 9.99999974E-6 : f32
    %168 = vector.broadcast %cst_71 : f32 to vector<32x1xf32>
    %169 = arith.addf %166, %168 : vector<32x1xf32>
    %170 = math.rsqrt %169 : vector<32x1xf32>
    %171 = arith.mulf %167, %170 : vector<32x1xf32>
    %c0_72 = arith.constant 0 : index
    %c0_73 = arith.constant 0 : index
    %172 = vector.load %arg14[%c0_72, %c0_73] : memref<32x1xf32, #tpu.memory_space<vmem>>, vector<32x1xf32>
    %173 = arith.mulf %162, %171 : vector<32x1xf32>
    %174 = arith.subf %172, %173 : vector<32x1xf32>
    %175 = vector.broadcast %171 : vector<32x1xf32> to vector<32x44xf32>
    %176 = arith.mulf %152, %175 : vector<32x44xf32>
    %177 = vector.broadcast %174 : vector<32x1xf32> to vector<32x44xf32>
    %178 = arith.addf %176, %177 : vector<32x44xf32>
    %c0_74 = arith.constant 0 : index
    %c0_75 = arith.constant 0 : index
    %179 = vector.load %arg16[%c0_74, %c0_75] : memref<44x14xf32, #tpu.memory_space<vmem>>, vector<44x14xf32>
    %cst_76 = arith.constant dense<0.000000e+00> : vector<32x14xf32>
    %180 = tpu.matmul %178, %179, %cst_76 {dimension_numbers = #tpu.dot_dimension_numbers<[1], [0], [0], [1], [0, 0, 1, 1], [], []>} : vector<32x44xf32>, vector<44x14xf32>, vector<32x14xf32> -> vector<32x14xf32>
    %181 = tpu.transpose %180, [1, 0] : vector<32x14xf32> -> vector<14x32xf32>
    %182 = vector.extract_strided_slice %181 {offsets = [0, 0], sizes = [2, 32], strides = [1, 1]} : vector<14x32xf32> to vector<2x32xf32>
    %183 = vector.extract_strided_slice %181 {offsets = [2, 0], sizes = [2, 32], strides = [1, 1]} : vector<14x32xf32> to vector<2x32xf32>
    %184 = vector.extract_strided_slice %181 {offsets = [4, 0], sizes = [2, 32], strides = [1, 1]} : vector<14x32xf32> to vector<2x32xf32>
    %185 = vector.extract_strided_slice %181 {offsets = [6, 0], sizes = [2, 32], strides = [1, 1]} : vector<14x32xf32> to vector<2x32xf32>
    %186 = vector.extract_strided_slice %181 {offsets = [8, 0], sizes = [2, 32], strides = [1, 1]} : vector<14x32xf32> to vector<2x32xf32>
    %187 = vector.extract_strided_slice %181 {offsets = [10, 0], sizes = [2, 32], strides = [1, 1]} : vector<14x32xf32> to vector<2x32xf32>
    %188 = vector.extract_strided_slice %181 {offsets = [12, 0], sizes = [2, 32], strides = [1, 1]} : vector<14x32xf32> to vector<2x32xf32>
    %189 = tpu.concatenate %182, %183, %184, %185, %186, %187, %188 in 1 : vector<2x32xf32>, vector<2x32xf32>, vector<2x32xf32>, vector<2x32xf32>, vector<2x32xf32>, vector<2x32xf32>, vector<2x32xf32> -> vector<2x224xf32>
    %c0_77 = arith.constant 0 : index
    %c0_78 = arith.constant 0 : index
    %190 = vector.load %arg17[%c0_77, %c0_78] : memref<224x40xf32, #tpu.memory_space<vmem>>, vector<224x40xf32>
    %cst_79 = arith.constant dense<0.000000e+00> : vector<2x40xf32>
    %191 = tpu.matmul %189, %190, %cst_79 {dimension_numbers = #tpu.dot_dimension_numbers<[1], [0], [0], [1], [0, 0, 1, 1], [], []>} : vector<2x224xf32>, vector<224x40xf32>, vector<2x40xf32> -> vector<2x40xf32>
    %c0_80 = arith.constant 0 : index
    %c0_81 = arith.constant 0 : index
    %192 = vector.load %arg18[%c0_80, %c0_81] : memref<1x40xf32, #tpu.memory_space<vmem>>, vector<1x40xf32>
    %193 = vector.broadcast %192 : vector<1x40xf32> to vector<2x40xf32>
    %194 = arith.addf %191, %193 : vector<2x40xf32>
    %c0_82 = arith.constant 0 : index
    %c0_83 = arith.constant 0 : index
    %195 = vector.load %arg19[%c0_82, %c0_83] : memref<40x20xf32, #tpu.memory_space<vmem>>, vector<40x20xf32>
    %cst_84 = arith.constant dense<0.000000e+00> : vector<2x20xf32>
    %196 = tpu.matmul %194, %195, %cst_84 {dimension_numbers = #tpu.dot_dimension_numbers<[1], [0], [0], [1], [0, 0, 1, 1], [], []>} : vector<2x40xf32>, vector<40x20xf32>, vector<2x20xf32> -> vector<2x20xf32>
    %c0_85 = arith.constant 0 : index
    %c0_86 = arith.constant 0 : index
    %197 = vector.load %arg20[%c0_85, %c0_86] : memref<1x20xf32, #tpu.memory_space<vmem>>, vector<1x20xf32>
    %198 = vector.broadcast %197 : vector<1x20xf32> to vector<2x20xf32>
    %199 = arith.addf %196, %198 : vector<2x20xf32>
    %c0_87 = arith.constant 0 : index
    %c0_88 = arith.constant 0 : index
    %200 = vector.load %arg21[%c0_87, %c0_88] : memref<2x20xf32, #tpu.memory_space<vmem>>, vector<2x20xf32>
    %201 = vector.shape_cast %200 : vector<2x20xf32> to vector<1x2x20xf32>
    %cst_89 = arith.constant 5.000000e-01 : f32
    %202 = vector.broadcast %cst_89 : f32 to vector<1x2x20xf32>
    %203 = arith.cmpf ogt, %201, %202 : vector<1x2x20xf32>
    %204 = vector.shape_cast %199 : vector<2x20xf32> to vector<2x1x20xf32>
    %cst_90 = arith.constant 0xFF800000 : f32
    %205 = vector.shape_cast %203 : vector<1x2x20xi1> to vector<1x2x20xi1>
    %206 = vector.broadcast %205 : vector<1x2x20xi1> to vector<2x2x20xi1>
    %207 = vector.shape_cast %204 : vector<2x1x20xf32> to vector<2x1x20xf32>
    %208 = vector.broadcast %207 : vector<2x1x20xf32> to vector<2x2x20xf32>
    %209 = vector.broadcast %cst_90 : f32 to vector<2x2x20xf32>
    %210 = arith.select %206, %208, %209 : vector<2x2x20xi1>, vector<2x2x20xf32>
    %cst_91 = arith.constant dense<0xFF800000> : vector<2x2xf32>
    %211 = vector.multi_reduction <maximumf>, %210, %cst_91 [2] : vector<2x2x20xf32> to vector<2x2xf32>
    %212 = vector.shape_cast %211 : vector<2x2xf32> to vector<2x2x1xf32>
    %213 = vector.shape_cast %200 : vector<2x20xf32> to vector<1x2x20xf32>
    %214 = vector.broadcast %212 : vector<2x2x1xf32> to vector<2x2x20xf32>
    %215 = vector.broadcast %213 : vector<1x2x20xf32> to vector<2x2x20xf32>
    %216 = arith.mulf %214, %215 : vector<2x2x20xf32>
    %cst_92 = arith.constant dense<0.000000e+00> : vector<2x20xf32>
    %217 = vector.multi_reduction <add>, %216, %cst_92 [1] : vector<2x2x20xf32> to vector<2x20xf32>
    %218 = arith.subf %199, %217 : vector<2x20xf32>
    %219 = math.exp %218 : vector<2x20xf32>
    %220 = vector.shape_cast %219 : vector<2x20xf32> to vector<2x1x20xf32>
    %221 = vector.shape_cast %200 : vector<2x20xf32> to vector<1x2x20xf32>
    %222 = vector.broadcast %220 : vector<2x1x20xf32> to vector<2x2x20xf32>
    %223 = vector.broadcast %221 : vector<1x2x20xf32> to vector<2x2x20xf32>
    %224 = arith.mulf %222, %223 : vector<2x2x20xf32>
    %cst_93 = arith.constant dense<0.000000e+00> : vector<2x2xf32>
    %225 = vector.multi_reduction <add>, %224, %cst_93 [2] : vector<2x2x20xf32> to vector<2x2xf32>
    %226 = vector.shape_cast %225 : vector<2x2xf32> to vector<2x2x1xf32>
    %227 = vector.shape_cast %200 : vector<2x20xf32> to vector<1x2x20xf32>
    %228 = vector.broadcast %226 : vector<2x2x1xf32> to vector<2x2x20xf32>
    %229 = vector.broadcast %227 : vector<1x2x20xf32> to vector<2x2x20xf32>
    %230 = arith.mulf %228, %229 : vector<2x2x20xf32>
    %cst_94 = arith.constant dense<0.000000e+00> : vector<2x20xf32>
    %231 = vector.multi_reduction <add>, %230, %cst_94 [1] : vector<2x2x20xf32> to vector<2x20xf32>
    %232 = arith.divf %219, %231 : vector<2x20xf32>
    %c0_95 = arith.constant 0 : index
    %c0_96 = arith.constant 0 : index
    %233 = vector.load %arg22[%c0_95, %c0_96] : memref<2x20xf32, #tpu.memory_space<vmem>>, vector<2x20xf32>
    tpu.vector_store %arg22[%c0_95, %c0_96], %232 {strides = array<i32>} : memref<2x20xf32, #tpu.memory_space<vmem>>, vector<2x20xf32>,
    return
  }
}

</mosaic_0001>

<llo_original>
// kernel: _forward_impl.1
$region0: #{_forward_impl.1}
  #allocation0 [shape = 'u32[]', space=smem, size = 0x4, offset = 0x4, fixed_abs, tag = 'smem constant byte address 0x4 - core index']
  #allocation1 [shape = 'u32[72,128]{1,0:T(1,128)}', space=vmem, size = 0x9000, scoped, tag = 'internal scratch']
  %s0 = inlined_call_operand.vmem [shape: f32[2,512], index: 0, kind: input, shape index: {}]
  %s1 = inlined_call_operand.vmem [shape: f32[8,1], index: 1, kind: input, shape index: {}]
  %s2 = inlined_call_operand.vmem [shape: f32[8,1], index: 2, kind: input, shape index: {}]
  %s3 = inlined_call_operand.vmem [shape: f32[8,1], index: 3, kind: input, shape index: {}]
  %s4 = inlined_call_operand.vmem [shape: f32[8,1], index: 4, kind: input, shape index: {}]
  %s5 = inlined_call_operand.vmem [shape: f32[16,88], index: 5, kind: input, shape index: {}]
  %s6 = inlined_call_operand.vmem [shape: f32[16,1], index: 6, kind: input, shape index: {}]
  %s7 = inlined_call_operand.vmem [shape: f32[16,1], index: 7, kind: input, shape index: {}]
  %s8 = inlined_call_operand.vmem [shape: f32[16,1], index: 8, kind: input, shape index: {}]
  %s9 = inlined_call_operand.vmem [shape: f32[1,512], index: 9, kind: input, shape index: {}]
  %s10 = inlined_call_operand.vmem [shape: f32[512,88], index: 10, kind: input, shape index: {}]
  %s11 = inlined_call_operand.vmem [shape: f32[32,32], index: 11, kind: input, shape index: {}]
  %s12 = inlined_call_operand.vmem [shape: f32[32,1], index: 12, kind: input, shape index: {}]
  %s13 = inlined_call_operand.vmem [shape: f32[32,1], index: 13, kind: input, shape index: {}]
  %s14 = inlined_call_operand.vmem [shape: f32[32,1], index: 14, kind: input, shape index: {}]
  %s15 = inlined_call_operand.vmem [shape: f32[1,44], index: 15, kind: input, shape index: {}]
  %s16 = inlined_call_operand.vmem [shape: f32[44,14], index: 16, kind: input, shape index: {}]
  %s17 = inlined_call_operand.vmem [shape: f32[224,40], index: 17, kind: input, shape index: {}]
  %s18 = inlined_call_operand.vmem [shape: f32[1,40], index: 18, kind: input, shape index: {}]
  %s19 = inlined_call_operand.vmem [shape: f32[40,20], index: 19, kind: input, shape index: {}]
  %s20 = inlined_call_operand.vmem [shape: f32[1,20], index: 20, kind: input, shape index: {}]
  %s21 = inlined_call_operand.vmem [shape: f32[2,20], index: 21, kind: input, shape index: {}]
  %s22 = inlined_call_operand.hbm [shape: f32[2,20], index: 22, kind: output, shape index: {}]
  %s23 = sld [smem:[#allocation0]]
  $region98: #{_forward_impl.1} parent=0
    _
  %s25 = ssub.s32 1, %s23
  %s26 = scalar_select 0, %s25, %s23
  $region1: #{_forward_impl.1} parent=0
    #allocation2 [shape = 'u8[1024]{0}', space=vmem, size = 0x400, scoped, tag = 'output window, operand 0, single buffered']
    #allocation3 [shape = 's32[1]{0}', space=sflag, size = 0x4, scoped, tag = 'scoped memory for _forward_impl.1']
    %27 = vsyncpa [#allocation3], 0
    // Predicated region
    $region2: #{_forward_impl.1} parent=1 // pred_check
      _
    $region3: #{_forward_impl.1} parent=1 // pred_check_branch
      %29 = sbr.rel (0) target = $region5
    $region4: #{_forward_impl.1} parent=1 // pred_region
      _
    $region5: #{_forward_impl.1} parent=1 // pred_fallthru
      _
    // Predicated region
    $region6: #{_forward_impl.1} parent=1 // pred_check
      _
    $region7: #{_forward_impl.1} parent=1 // pred_check_branch
      %31 = sbr.rel (0) target = $region9
    $region8: #{_forward_impl.1} parent=1 // pred_region
      _
    $region9: #{_forward_impl.1} parent=1 // pred_fallthru
      _
    // Predicated region
    $region10: #{_forward_impl.1} parent=1 // pred_check
      _
    $region11: #{_forward_impl.1} parent=1 // pred_check_branch
      %33 = sbr.rel (0) target = $region13
    $region12: #{_forward_impl.1} parent=1 // pred_region
      _
    $region13: #{_forward_impl.1} parent=1 // pred_fallthru
      _
    // Predicated region
    $region14: #{_forward_impl.1} parent=1 // pred_check
      _
    $region15: #{_forward_impl.1} parent=1 // pred_check_branch
      %35 = sbr.rel (0) target = $region17
    $region16: #{_forward_impl.1} parent=1 // pred_region
      _
    $region17: #{_forward_impl.1} parent=1 // pred_fallthru
      _
    // Predicated region
    $region18: #{_forward_impl.1} parent=1 // pred_check
      _
    $region19: #{_forward_impl.1} parent=1 // pred_check_branch
      %37 = sbr.rel (0) target = $region21
    $region20: #{_forward_impl.1} parent=1 // pred_region
      _
    $region21: #{_forward_impl.1} parent=1 // pred_fallthru
      _
    // Predicated region
    $region22: #{_forward_impl.1} parent=1 // pred_check
      _
    $region23: #{_forward_impl.1} parent=1 // pred_check_branch
      %39 = sbr.rel (0) target = $region25
    $region24: #{_forward_impl.1} parent=1 // pred_region
      _
    $region25: #{_forward_impl.1} parent=1 // pred_fallthru
      _
    // Predicated region
    $region26: #{_forward_impl.1} parent=1 // pred_check
      _
    $region27: #{_forward_impl.1} parent=1 // pred_check_branch
      %41 = sbr.rel (0) target = $region29
    $region28: #{_forward_impl.1} parent=1 // pred_region
      _
    $region29: #{_forward_impl.1} parent=1 // pred_fallthru
      _
    // Predicated region
    $region30: #{_forward_impl.1} parent=1 // pred_check
      _
    $region31: #{_forward_impl.1} parent=1 // pred_check_branch
      %43 = sbr.rel (0) target = $region33
    $region32: #{_forward_impl.1} parent=1 // pred_region
      _
    $region33: #{_forward_impl.1} parent=1 // pred_fallthru
      _
    // Predicated region
    $region34: #{_forward_impl.1} parent=1 // pred_check
      _
    $region35: #{_forward_impl.1} parent=1 // pred_check_branch
      %45 = sbr.rel (0) target = $region37
    $region36: #{_forward_impl.1} parent=1 // pred_region
      _
    $region37: #{_forward_impl.1} parent=1 // pred_fallthru
      _
    // Predicated region
    $region38: #{_forward_impl.1} parent=1 // pred_check
      _
    $region39: #{_forward_impl.1} parent=1 // pred_check_branch
      %47 = sbr.rel (0) target = $region41
    $region40: #{_forward_impl.1} parent=1 // pred_region
      _
    $region41: #{_forward_impl.1} parent=1 // pred_fallthru
      _
    // Predicated region
    $region42: #{_forward_impl.1} parent=1 // pred_check
      _
    $region43: #{_forward_impl.1} parent=1 // pred_check_branch
      %49 = sbr.rel (0) target = $region45
    $region44: #{_forward_impl.1} parent=1 // pred_region
      _
    $region45: #{_forward_impl.1} parent=1 // pred_fallthru
      _
    // Predicated region
    $region46: #{_forward_impl.1} parent=1 // pred_check
      _
    $region47: #{_forward_impl.1} parent=1 // pred_check_branch
      %51 = sbr.rel (0) target = $region49
    $region48: #{_forward_impl.1} parent=1 // pred_region
      _
    $region49: #{_forward_impl.1} parent=1 // pred_fallthru
      _
    // Predicated region
    $region50: #{_forward_impl.1} parent=1 // pred_check
      _
    $region51: #{_forward_impl.1} parent=1 // pred_check_branch
      %53 = sbr.rel (0) target = $region53
    $region52: #{_forward_impl.1} parent=1 // pred_region
      _
    $region53: #{_forward_impl.1} parent=1 // pred_fallthru
      _
    // Predicated region
    $region54: #{_forward_impl.1} parent=1 // pred_check
      _
    $region55: #{_forward_impl.1} parent=1 // pred_check_branch
      %55 = sbr.rel (0) target = $region57
    $region56: #{_forward_impl.1} parent=1 // pred_region
      _
    $region57: #{_forward_impl.1} parent=1 // pred_fallthru
      _
    // Predicated region
    $region58: #{_forward_impl.1} parent=1 // pred_check
      _
    $region59: #{_forward_impl.1} parent=1 // pred_check_branch
      %57 = sbr.rel (0) target = $region61
    $region60: #{_forward_impl.1} parent=1 // pred_region
      _
    $region61: #{_forward_impl.1} parent=1 // pred_fallthru
      _
    // Predicated region
    $region62: #{_forward_impl.1} parent=1 // pred_check
      _
    $region63: #{_forward_impl.1} parent=1 // pred_check_branch
      %59 = sbr.rel (0) target = $region65
    $region64: #{_forward_impl.1} parent=1 // pred_region
      _
    $region65: #{_forward_impl.1} parent=1 // pred_fallthru
      _
    // Predicated region
    $region66: #{_forward_impl.1} parent=1 // pred_check
      _
    $region67: #{_forward_impl.1} parent=1 // pred_check_branch
      %61 = sbr.rel (0) target = $region69
    $region68: #{_forward_impl.1} parent=1 // pred_region
      _
    $region69: #{_forward_impl.1} parent=1 // pred_fallthru
      _
    // Predicated region
    $region70: #{_forward_impl.1} parent=1 // pred_check
      _
    $region71: #{_forward_impl.1} parent=1 // pred_check_branch
      %63 = sbr.rel (0) target = $region73
    $region72: #{_forward_impl.1} parent=1 // pred_region
      _
    $region73: #{_forward_impl.1} parent=1 // pred_fallthru
      _
    // Predicated region
    $region74: #{_forward_impl.1} parent=1 // pred_check
      _
    $region75: #{_forward_impl.1} parent=1 // pred_check_branch
      %65 = sbr.rel (0) target = $region77
    $region76: #{_forward_impl.1} parent=1 // pred_region
      _
    $region77: #{_forward_impl.1} parent=1 // pred_fallthru
      _
    // Predicated region
    $region78: #{_forward_impl.1} parent=1 // pred_check
      _
    $region79: #{_forward_impl.1} parent=1 // pred_check_branch
      %67 = sbr.rel (0) target = $region81
    $region80: #{_forward_impl.1} parent=1 // pred_region
      _
    $region81: #{_forward_impl.1} parent=1 // pred_fallthru
      _
    // Predicated region
    $region82: #{_forward_impl.1} parent=1 // pred_check
      _
    $region83: #{_forward_impl.1} parent=1 // pred_check_branch
      %69 = sbr.rel (0) target = $region85
    $region84: #{_forward_impl.1} parent=1 // pred_region
      _
    $region85: #{_forward_impl.1} parent=1 // pred_fallthru
      _
    // Predicated region
    $region86: #{_forward_impl.1} parent=1 // pred_check
      _
    $region87: #{_forward_impl.1} parent=1 // pred_check_branch
      %71 = sbr.rel (0) target = $region89
    $region88: #{_forward_impl.1} parent=1 // pred_region
      _
    $region89: #{_forward_impl.1} parent=1 // pred_fallthru
      _
    %v72 = vld [vmem:[%s0] ss:$2 sm:$0xf]
    %s73 = scalar_lea.vmem %s0, 1
    %v74 = vld [vmem:[%s73] ss:$2 sm:$0xf]
    %v75 = vld [vmem:[%s1] sm:$0xff]
    %v76 = vld [vmem:[%s2] sm:$0xff]
    %78 = vset.pattern.permute.xlu0 0
    %79 = vperm.xlu0 %78, %v75
    %v80 = vpop.permute.xlu0 %79
    %v83 = vperm.slane %v72, 0
    %v84 = vperm.slane %v72, 1
    %v85 = vperm.slane %v72, 2
    %v86 = vperm.slane %v72, 3
    %v91 = vmul.f32 %v80, %v83
    %v92 = vmul.f32 %v80, %v84
    %v93 = vmul.f32 %v80, %v85
    %v94 = vmul.f32 %v80, %v86
    %96 = vset.pattern.permute.xlu0 0
    %97 = vperm.xlu0 %96, %v76
    %v98 = vpop.permute.xlu0 %97
    %v100 = vadd.f32 %v91, %v98
    %v101 = vadd.f32 %v92, %v98
    %v102 = vadd.f32 %v93, %v98
    %v103 = vadd.f32 %v94, %v98
    %vm104 = vcmp.gt.f32.partialorder %v100, 0.0
    %vm105 = vcmp.gt.f32.partialorder %v101, 0.0
    %vm106 = vcmp.gt.f32.partialorder %v102, 0.0
    %vm107 = vcmp.gt.f32.partialorder %v103, 0.0
    %v108 = vmin.f32 %v100, 0.0
    %v109 = vmin.f32 %v101, 0.0
    %v110 = vmin.f32 %v102, 0.0
    %v111 = vmin.f32 %v103, 0.0
    %v112 = vmul.f32 %v108, 1.442695
    %v113 = vpow.pop %v112
    %v114 = vmul.f32 %v109, 1.442695
    %v115 = vpow.pop %v114
    %v116 = vmul.f32 %v110, 1.442695
    %v117 = vpow.pop %v116
    %v118 = vmul.f32 %v111, 1.442695
    %v119 = vpow.pop %v118
    %v120 = vsub.f32 %v113, 1.0
    %v121 = vsub.f32 %v115, 1.0
    %v122 = vsub.f32 %v117, 1.0
    %v123 = vsub.f32 %v119, 1.0
    %v124 = vmul.f32 %v120, 1.6732632
    %v125 = vmul.f32 %v121, 1.6732632
    %v126 = vmul.f32 %v122, 1.6732632
    %v127 = vmul.f32 %v123, 1.6732632
    %v128 = vsel %vm104, %v100, %v124
    %v129 = vsel %vm105, %v101, %v125
    %v130 = vsel %vm106, %v102, %v126
    %v131 = vsel %vm107, %v103, %v127
    %v132 = vmul.f32 %v128, 1.050701
    %v133 = vmul.f32 %v129, 1.050701
    %v134 = vmul.f32 %v130, 1.050701
    %v135 = vmul.f32 %v131, 1.050701
    %v137 = vperm.slane %v74, 0
    %v138 = vperm.slane %v74, 1
    %v139 = vperm.slane %v74, 2
    %v140 = vperm.slane %v74, 3
    %v145 = vmul.f32 %v80, %v137
    %v146 = vmul.f32 %v80, %v138
    %v147 = vmul.f32 %v80, %v139
    %v148 = vmul.f32 %v80, %v140
    %v149 = vadd.f32 %v145, %v98
    %v150 = vadd.f32 %v146, %v98
    %v151 = vadd.f32 %v147, %v98
    %v152 = vadd.f32 %v148, %v98
    %vm153 = vcmp.gt.f32.partialorder %v149, 0.0
    %vm154 = vcmp.gt.f32.partialorder %v150, 0.0
    %vm155 = vcmp.gt.f32.partialorder %v151, 0.0
    %vm156 = vcmp.gt.f32.partialorder %v152, 0.0
    %v157 = vmin.f32 %v149, 0.0
    %v158 = vmin.f32 %v150, 0.0
    %v159 = vmin.f32 %v151, 0.0
    %v160 = vmin.f32 %v152, 0.0
    %v161 = vmul.f32 %v157, 1.442695
    %v162 = vpow.pop %v161
    %v163 = vmul.f32 %v158, 1.442695
    %v164 = vpow.pop %v163
    %v165 = vmul.f32 %v159, 1.442695
    %v166 = vpow.pop %v165
    %v167 = vmul.f32 %v160, 1.442695
    %v168 = vpow.pop %v167
    %v169 = vsub.f32 %v162, 1.0
    %v170 = vsub.f32 %v164, 1.0
    %v171 = vsub.f32 %v166, 1.0
    %v172 = vsub.f32 %v168, 1.0
    %v173 = vmul.f32 %v169, 1.6732632
    %v174 = vmul.f32 %v170, 1.6732632
    %v175 = vmul.f32 %v171, 1.6732632
    %v176 = vmul.f32 %v172, 1.6732632
    %v177 = vsel %vm153, %v149, %v173
    %v178 = vsel %vm154, %v150, %v174
    %v179 = vsel %vm155, %v151, %v175
    %v180 = vsel %vm156, %v152, %v176
    %v181 = vmul.f32 %v177, 1.050701
    %v182 = vmul.f32 %v178, 1.050701
    %v183 = vmul.f32 %v179, 1.050701
    %v184 = vmul.f32 %v180, 1.050701
    %v185 = vadd.f32 %v132, %v133
    %v186 = vadd.f32 %v185, %v134
    %v187 = vadd.f32 %v186, %v135
    %188 = vadd.xlane.f32.xlu0 %v187
    %v189 = vpop.xlane.xlu0 %188
    %v190 = vadd.f32 %v181, %v182
    %v191 = vadd.f32 %v190, %v183
    %v192 = vadd.f32 %v191, %v184
    %193 = vadd.xlane.f32.xlu0 %v192
    %v194 = vpop.xlane.xlu0 %193
    %v195 = vadd.f32 %v189, %v194
    %v196 = vmul.f32 %v132, %v132
    %v197 = vmul.f32 %v133, %v133
    %v198 = vmul.f32 %v134, %v134
    %v199 = vmul.f32 %v135, %v135
    %v200 = vadd.f32 %v196, %v197
    %v201 = vadd.f32 %v200, %v198
    %v202 = vadd.f32 %v201, %v199
    %203 = vadd.xlane.f32.xlu0 %v202
    %v204 = vpop.xlane.xlu0 %203
    %v205 = vmul.f32 %v181, %v181
    %v206 = vmul.f32 %v182, %v182
    %v207 = vmul.f32 %v183, %v183
    %v208 = vmul.f32 %v184, %v184
    %v209 = vadd.f32 %v205, %v206
    %v210 = vadd.f32 %v209, %v207
    %v211 = vadd.f32 %v210, %v208
    %212 = vadd.xlane.f32.xlu0 %v211
    %v213 = vpop.xlane.xlu0 %212
    %v214 = vadd.f32 %v204, %v213
    %v215 = vrcp.pop 1024.0
    %v216 = vmul.f32 1024.0, %v215
    %v217 = vsub.f32 1.0, %v216
    %v218 = vmul.f32 %v215, %v217
    %v219 = vadd.f32 %v215, %v218
    %vm220 = vweird.f32 %v215
    %v221 = vsel %vm220, %v215, %v219
    %v222 = vmul.f32 %v195, %v221
    %v223 = vmul.f32 %v214, %v221
    %v224 = vmul.f32 %v222, %v222
    %v225 = vsub.f32 %v223, %v224
    %v226 = vld [vmem:[%s3] sm:$0xff]
    %v227 = vadd.f32 %v225, 1e-05
    %v228 = vrsqrt.pop %v227
    %v229 = vmul.f32 %v228, %v227
    %v230 = vmul.f32 %v229, %v228
    %v231 = vmul.f32 0.5, %v230
    %v232 = vsub.f32 1.5, %v231
    %v233 = vmul.f32 %v228, %v232
    %vm234 = vweird.f32 %v227
    %vm235 = vweird.f32 %v228
    %vm236 = vmor %vm234, %vm235
    %v237 = vsel %vm236, %v228, %v233
    %v238 = vmul.f32 %v226, %v237
    %v239 = vld [vmem:[%s4] sm:$0xff]
    %v240 = vmul.f32 %v222, %v238
    %v241 = vsub.f32 %v239, %v240
    %v242 = vmul.f32 %v238, 0.5
    %v243 = vadd.f32 %v132, %v181
    %v244 = vadd.f32 %v133, %v182
    %v245 = vadd.f32 %v134, %v183
    %v246 = vadd.f32 %v135, %v184
    %248 = vset.pattern.permute.xlu0 0
    %249 = vperm.xlu0 %248, %v242
    %v250 = vpop.permute.xlu0 %249
    %v252 = vmul.f32 %v250, %v243
    %v253 = vmul.f32 %v250, %v244
    %v254 = vmul.f32 %v250, %v245
    %v255 = vmul.f32 %v250, %v246
    %257 = vset.pattern.permute.xlu0 0
    %258 = vperm.xlu0 %257, %v241
    %v259 = vpop.permute.xlu0 %258
    %v261 = vadd.f32 %v252, %v259
    %v262 = vadd.f32 %v253, %v259
    %v263 = vadd.f32 %v254, %v259
    %v264 = vadd.f32 %v255, %v259
    %265 = vrot.lane.b32.xlu0 %v261, 127
    %v266 = vpop.permute.xlu0 %265
    %267 = vrot.lane.b32.xlu0 %v262, 127
    %v268 = vpop.permute.xlu0 %267
    %269 = vrot.lane.b32.xlu0 %v263, 127
    %v270 = vpop.permute.xlu0 %269
    %271 = vrot.lane.b32.xlu0 %v264, 127
    %v272 = vpop.permute.xlu0 %271
    %v273 = vlaneseq
    %v274 = vand.u32 %v273, 127
    %vm275 = vcmp.lt.s32.totalorder %v274, 127
    %v276 = vsel %vm275, %v270, %v272
    %v277 = vsel %vm275, %v268, %v270
    %v278 = vsel %vm275, %v266, %v268
    %v279 = vsel %vm275, %v272, %v266
    %280 = vrot.lane.b32.xlu0 %v261, 126
    %v281 = vpop.permute.xlu0 %280
    %282 = vrot.lane.b32.xlu0 %v262, 126
    %v283 = vpop.permute.xlu0 %282
    %284 = vrot.lane.b32.xlu0 %v263, 126
    %v285 = vpop.permute.xlu0 %284
    %286 = vrot.lane.b32.xlu0 %v264, 126
    %v287 = vpop.permute.xlu0 %286
    %vm288 = vcmp.lt.s32.totalorder %v274, 126
    %v289 = vsel %vm288, %v285, %v287
    %v290 = vsel %vm288, %v283, %v285
    %v291 = vsel %vm288, %v281, %v283
    %v292 = vsel %vm288, %v287, %v281
    %293 = vrot.lane.b32.xlu0 %v261, 125
    %v294 = vpop.permute.xlu0 %293
    %295 = vrot.lane.b32.xlu0 %v262, 125
    %v296 = vpop.permute.xlu0 %295
    %297 = vrot.lane.b32.xlu0 %v263, 125
    %v298 = vpop.permute.xlu0 %297
    %299 = vrot.lane.b32.xlu0 %v264, 125
    %v300 = vpop.permute.xlu0 %299
    %vm301 = vcmp.lt.s32.totalorder %v274, 125
    %v302 = vsel %vm301, %v298, %v300
    %v303 = vsel %vm301, %v296, %v298
    %v304 = vsel %vm301, %v294, %v296
    %v305 = vsel %vm301, %v300, %v294
    %306 = vrot.lane.b32.xlu0 %v261, 124
    %v307 = vpop.permute.xlu0 %306
    %308 = vrot.lane.b32.xlu0 %v262, 124
    %v309 = vpop.permute.xlu0 %308
    %310 = vrot.lane.b32.xlu0 %v263, 124
    %v311 = vpop.permute.xlu0 %310
    %312 = vrot.lane.b32.xlu0 %v264, 124
    %v313 = vpop.permute.xlu0 %312
    %vm314 = vcmp.lt.s32.totalorder %v274, 124
    %v315 = vsel %vm314, %v311, %v313
    %v316 = vsel %vm314, %v309, %v311
    %v317 = vsel %vm314, %v307, %v309
    %v318 = vsel %vm314, %v313, %v307
    %319 = vrot.lane.b32.xlu0 %v261, 123
    %v320 = vpop.permute.xlu0 %319
    %321 = vrot.lane.b32.xlu0 %v262, 123
    %v322 = vpop.permute.xlu0 %321
    %323 = vrot.lane.b32.xlu0 %v263, 123
    %v324 = vpop.permute.xlu0 %323
    %325 = vrot.lane.b32.xlu0 %v264, 123
    %v326 = vpop.permute.xlu0 %325
    %vm327 = vcmp.lt.s32.totalorder %v274, 123
    %v328 = vsel %vm327, %v324, %v326
    %v329 = vsel %vm327, %v322, %v324
    %v330 = vsel %vm327, %v320, %v322
    %v331 = vsel %vm327, %v326, %v320
    %332 = vrot.lane.b32.xlu0 %v261, 122
    %v333 = vpop.permute.xlu0 %332
    %334 = vrot.lane.b32.xlu0 %v262, 122
    %v335 = vpop.permute.xlu0 %334
    %336 = vrot.lane.b32.xlu0 %v263, 122
    %v337 = vpop.permute.xlu0 %336
    %338 = vrot.lane.b32.xlu0 %v264, 122
    %v339 = vpop.permute.xlu0 %338
    %vm340 = vcmp.lt.s32.totalorder %v274, 122
    %v341 = vsel %vm340, %v337, %v339
    %v342 = vsel %vm340, %v335, %v337
    %v343 = vsel %vm340, %v333, %v335
    %v344 = vsel %vm340, %v339, %v333
    %345 = vrot.lane.b32.xlu0 %v261, 121
    %v346 = vpop.permute.xlu0 %345
    %347 = vrot.lane.b32.xlu0 %v262, 121
    %v348 = vpop.permute.xlu0 %347
    %349 = vrot.lane.b32.xlu0 %v263, 121
    %v350 = vpop.permute.xlu0 %349
    %351 = vrot.lane.b32.xlu0 %v264, 121
    %v352 = vpop.permute.xlu0 %351
    %vm353 = vcmp.lt.s32.totalorder %v274, 121
    %v354 = vsel %vm353, %v350, %v352
    %v355 = vsel %vm353, %v348, %v350
    %v356 = vsel %vm353, %v346, %v348
    %v357 = vsel %vm353, %v352, %v346
    %358 = vrot.lane.b32.xlu0 %v261, 120
    %v359 = vpop.permute.xlu0 %358
    %360 = vrot.lane.b32.xlu0 %v262, 120
    %v361 = vpop.permute.xlu0 %360
    %362 = vrot.lane.b32.xlu0 %v263, 120
    %v363 = vpop.permute.xlu0 %362
    %364 = vrot.lane.b32.xlu0 %v264, 120
    %v365 = vpop.permute.xlu0 %364
    %vm366 = vcmp.lt.s32.totalorder %v274, 120
    %v367 = vsel %vm366, %v363, %v365
    %v368 = vsel %vm366, %v361, %v363
    %v369 = vsel %vm366, %v359, %v361
    %v370 = vsel %vm366, %v365, %v359
    %371 = vrot.lane.b32.xlu0 %v261, 119
    %v372 = vpop.permute.xlu0 %371
    %373 = vrot.lane.b32.xlu0 %v262, 119
    %v374 = vpop.permute.xlu0 %373
    %375 = vrot.lane.b32.xlu0 %v263, 119
    %v376 = vpop.permute.xlu0 %375
    %377 = vrot.lane.b32.xlu0 %v264, 119
    %v378 = vpop.permute.xlu0 %377
    %vm379 = vcmp.lt.s32.totalorder %v274, 119
    %v380 = vsel %vm379, %v376, %v378
    %v381 = vsel %vm379, %v374, %v376
    %v382 = vsel %vm379, %v372, %v374
    %v383 = vsel %vm379, %v378, %v372
    %384 = vrot.lane.b32.xlu0 %v261, 118
    %v385 = vpop.permute.xlu0 %384
    %386 = vrot.lane.b32.xlu0 %v262, 118
    %v387 = vpop.permute.xlu0 %386
    %388 = vrot.lane.b32.xlu0 %v263, 118
    %v389 = vpop.permute.xlu0 %388
    %390 = vrot.lane.b32.xlu0 %v264, 118
    %v391 = vpop.permute.xlu0 %390
    %vm392 = vcmp.lt.s32.totalorder %v274, 118
    %v393 = vsel %vm392, %v389, %v391
    %v394 = vsel %vm392, %v387, %v389
    %v395 = vsel %vm392, %v385, %v387
    %v396 = vsel %vm392, %v391, %v385
    %v397 = vld [vmem:[%s5] sm:$0xff]
    %v398 = vld [vmem:[%s5 + $0x8] sm:$0xff]
    %v399 = vld [vmem:[%s6] sm:$0xff]
    %v400 = vld [vmem:[%s6 + $0x8] sm:$0xff]
    %402 = vset.pattern.permute.xlu0 0
    %403 = vperm.xlu0 %402, %v399
    %v404 = vpop.permute.xlu0 %403
    %407 = vset.pattern.permute.xlu0 0
    %408 = vperm.xlu0 %407, %v400
    %v409 = vpop.permute.xlu0 %408
    %vm411 = vcmask 719872
    %v413 = vsel %vm411, %v397, 0
    %v416 = vsel %vm411, %v398, 0
    %418 = vmatpush.msra.mxu0 0.0
    %419 = vmatpush.msra.mxu0 0.0
    %420 = vmatpush.msra.mxu0 0.0
    %421 = vmatpush.msra.mxu0 0.0
    %422 = vmatpush.msra.mxu0 0.0
    %423 = vmatpush.msra.mxu0 %v395
    %424 = vmatpush.msra.mxu0 %v382
    %425 = vmatpush.msra.mxu0 %v369
    %426 = vmatpush.msra.mxu0 %v356
    %427 = vmatpush.msra.mxu0 %v343
    %428 = vmatpush.msra.mxu0 %v330
    %429 = vmatpush.msra.mxu0 %v317
    %430 = vmatpush.msra.mxu0 %v304
    %431 = vmatpush.msra.mxu0 %v291
    %432 = vmatpush.msra.mxu0 %v278
    %433 = vmatpush.msra.mxu0 %v261
    %434 = vmatmul.f32.gmra.mxu0 %v413
    %v435 = vpop.f32.mrf.mxu0
    %v436 = vadd.f32 %v404, %v435
    %437 = vmatmul.f32.gmra.mxu0 %v416
    %v438 = vpop.f32.mrf.mxu0
    %v439 = vadd.f32 %v409, %v438
    %440 = vdwg.mxu0
    %441 = vmatpush.msra.mxu0 0.0
    %442 = vmatpush.msra.mxu0 0.0
    %443 = vmatpush.msra.mxu0 0.0
    %444 = vmatpush.msra.mxu0 0.0
    %445 = vmatpush.msra.mxu0 0.0
    %446 = vmatpush.msra.mxu0 %v394
    %447 = vmatpush.msra.mxu0 %v381
    %448 = vmatpush.msra.mxu0 %v368
    %449 = vmatpush.msra.mxu0 %v355
    %450 = vmatpush.msra.mxu0 %v342
    %451 = vmatpush.msra.mxu0 %v329
    %452 = vmatpush.msra.mxu0 %v316
    %453 = vmatpush.msra.mxu0 %v303
    %454 = vmatpush.msra.mxu0 %v290
    %455 = vmatpush.msra.mxu0 %v277
    %456 = vmatpush.msra.mxu0 %v262
    %457 = vmatmul.f32.gmra.mxu0 %v413
    %v458 = vpop.f32.mrf.mxu0
    %v459 = vadd.f32 %v404, %v458
    %460 = vmatmul.f32.gmra.mxu0 %v416
    %v461 = vpop.f32.mrf.mxu0
    %v462 = vadd.f32 %v409, %v461
    %463 = vdwg.mxu0
    %464 = vmatpush.msra.mxu0 0.0
    %465 = vmatpush.msra.mxu0 0.0
    %466 = vmatpush.msra.mxu0 0.0
    %467 = vmatpush.msra.mxu0 0.0
    %468 = vmatpush.msra.mxu0 0.0
    %469 = vmatpush.msra.mxu0 %v393
    %470 = vmatpush.msra.mxu0 %v380
    %471 = vmatpush.msra.mxu0 %v367
    %472 = vmatpush.msra.mxu0 %v354
    %473 = vmatpush.msra.mxu0 %v341
    %474 = vmatpush.msra.mxu0 %v328
    %475 = vmatpush.msra.mxu0 %v315
    %476 = vmatpush.msra.mxu0 %v302
    %477 = vmatpush.msra.mxu0 %v289
    %478 = vmatpush.msra.mxu0 %v276
    %479 = vmatpush.msra.mxu0 %v263
    %480 = vmatmul.f32.gmra.mxu0 %v413
    %v481 = vpop.f32.mrf.mxu0
    %v482 = vadd.f32 %v404, %v481
    %483 = vmatmul.f32.gmra.mxu0 %v416
    %v484 = vpop.f32.mrf.mxu0
    %v485 = vadd.f32 %v409, %v484
    %486 = vdwg.mxu0
    %487 = vmatpush.msra.mxu0 0.0
    %488 = vmatpush.msra.mxu0 0.0
    %489 = vmatpush.msra.mxu0 0.0
    %490 = vmatpush.msra.mxu0 0.0
    %491 = vmatpush.msra.mxu0 0.0
    %492 = vmatpush.msra.mxu0 %v396
    %493 = vmatpush.msra.mxu0 %v383
    %494 = vmatpush.msra.mxu0 %v370
    %495 = vmatpush.msra.mxu0 %v357
    %496 = vmatpush.msra.mxu0 %v344
    %497 = vmatpush.msra.mxu0 %v331
    %498 = vmatpush.msra.mxu0 %v318
    %499 = vmatpush.msra.mxu0 %v305
    %500 = vmatpush.msra.mxu0 %v292
    %501 = vmatpush.msra.mxu0 %v279
    %502 = vmatpush.msra.mxu0 %v264
    %503 = vmatmul.f32.gmra.mxu0 %v413
    %v504 = vpop.f32.mrf.mxu0
    %v505 = vadd.f32 %v404, %v504
    %506 = vmatmul.f32.gmra.mxu0 %v416
    %v507 = vpop.f32.mrf.mxu0
    %v508 = vadd.f32 %v409, %v507
    %509 = vdwg.mxu0
    %vm510 = vcmp.gt.f32.partialorder %v436, 0.0
    %vm511 = vcmp.gt.f32.partialorder %v459, 0.0
    %vm512 = vcmp.gt.f32.partialorder %v482, 0.0
    %vm513 = vcmp.gt.f32.partialorder %v505, 0.0
    %vm514 = vcmp.gt.f32.partialorder %v439, 0.0
    %vm515 = vcmp.gt.f32.partialorder %v462, 0.0
    %vm516 = vcmp.gt.f32.partialorder %v485, 0.0
    %vm517 = vcmp.gt.f32.partialorder %v508, 0.0
    %v518 = vmin.f32 %v436, 0.0
    %v519 = vmin.f32 %v459, 0.0
    %v520 = vmin.f32 %v482, 0.0
    %v521 = vmin.f32 %v505, 0.0
    %v522 = vmin.f32 %v439, 0.0
    %v523 = vmin.f32 %v462, 0.0
    %v524 = vmin.f32 %v485, 0.0
    %v525 = vmin.f32 %v508, 0.0
    %v526 = vmul.f32 %v518, 1.442695
    %v527 = vpow.pop %v526
    %v528 = vmul.f32 %v519, 1.442695
    %v529 = vpow.pop %v528
    %v530 = vmul.f32 %v520, 1.442695
    %v531 = vpow.pop %v530
    %v532 = vmul.f32 %v521, 1.442695
    %v533 = vpow.pop %v532
    %v534 = vmul.f32 %v522, 1.442695
    %v535 = vpow.pop %v534
    %v536 = vmul.f32 %v523, 1.442695
    %v537 = vpow.pop %v536
    %v538 = vmul.f32 %v524, 1.442695
    %v539 = vpow.pop %v538
    %v540 = vmul.f32 %v525, 1.442695
    %v541 = vpow.pop %v540
    %v542 = vsub.f32 %v527, 1.0
    %v543 = vsub.f32 %v529, 1.0
    %v544 = vsub.f32 %v531, 1.0
    %v545 = vsub.f32 %v533, 1.0
    %v546 = vsub.f32 %v535, 1.0
    %v547 = vsub.f32 %v537, 1.0
    %v548 = vsub.f32 %v539, 1.0
    %v549 = vsub.f32 %v541, 1.0
    %v550 = vmul.f32 %v542, 1.6732632
    %v551 = vmul.f32 %v543, 1.6732632
    %v552 = vmul.f32 %v544, 1.6732632
    %v553 = vmul.f32 %v545, 1.6732632
    %v554 = vmul.f32 %v546, 1.6732632
    %v555 = vmul.f32 %v547, 1.6732632
    %v556 = vmul.f32 %v548, 1.6732632
    %v557 = vmul.f32 %v549, 1.6732632
    %v558 = vsel %vm510, %v436, %v550
    %v559 = vsel %vm511, %v459, %v551
    %v560 = vsel %vm512, %v482, %v552
    %v561 = vsel %vm513, %v505, %v553
    %v562 = vsel %vm514, %v439, %v554
    %v563 = vsel %vm515, %v462, %v555
    %v564 = vsel %vm516, %v485, %v556
    %v565 = vsel %vm517, %v508, %v557
    %v566 = vmul.f32 %v558, 1.050701
    %v567 = vmul.f32 %v559, 1.050701
    %v568 = vmul.f32 %v560, 1.050701
    %v569 = vmul.f32 %v561, 1.050701
    %v570 = vmul.f32 %v562, 1.050701
    %v571 = vmul.f32 %v563, 1.050701
    %v572 = vmul.f32 %v564, 1.050701
    %v573 = vmul.f32 %v565, 1.050701
    %v574 = vld [vmem:[%s9] sm:$0xf]
    %v576 = vperm.slane %v574, 0
    %v577 = vperm.slane %v574, 1
    %v578 = vperm.slane %v574, 2
    %v579 = vperm.slane %v574, 3
    %v584 = vmul.f32 %v566, %v576
    %v585 = vmul.f32 %v567, %v577
    %v586 = vmul.f32 %v568, %v578
    %v587 = vmul.f32 %v569, %v579
    %v588 = vmul.f32 %v570, %v576
    %v589 = vmul.f32 %v571, %v577
    %v590 = vmul.f32 %v572, %v578
    %v591 = vmul.f32 %v573, %v579
    %vm592 = vcmask 1040384
    %v593 = vsel %vm592, %v576, 0.0
    %v594 = vsel %vm592, %v577, 0.0
    %v595 = vadd.f32 %v593, %v594
    %v596 = vsel %vm592, %v578, 0.0
    %v597 = vadd.f32 %v595, %v596
    %v598 = vsel %vm592, %v579, 0.0
    %v599 = vadd.f32 %v597, %v598
    %600 = vadd.xlane.f32.xlu0 %v599
    %v601 = vpop.xlane.xlu0 %600
    %v602 = vadd.f32 %v584, %v585
    %v603 = vadd.f32 %v602, %v586
    %v604 = vadd.f32 %v603, %v587
    %605 = vadd.xlane.f32.xlu0 %v604
    %v606 = vpop.xlane.xlu0 %605
    %v607 = vadd.f32 %v588, %v589
    %v608 = vadd.f32 %v607, %v590
    %v609 = vadd.f32 %v608, %v591
    %610 = vadd.xlane.f32.xlu0 %v609
    %v611 = vpop.xlane.xlu0 %610
    %v612 = vmul.f32 %v584, %v584
    %v613 = vmul.f32 %v585, %v585
    %v614 = vmul.f32 %v586, %v586
    %v615 = vmul.f32 %v587, %v587
    %v616 = vmul.f32 %v588, %v588
    %v617 = vmul.f32 %v589, %v589
    %v618 = vmul.f32 %v590, %v590
    %v619 = vmul.f32 %v591, %v591
    %v620 = vadd.f32 %v612, %v613
    %v621 = vadd.f32 %v620, %v614
    %v622 = vadd.f32 %v621, %v615
    %623 = vadd.xlane.f32.xlu0 %v622
    %v624 = vpop.xlane.xlu0 %623
    %v625 = vadd.f32 %v616, %v617
    %v626 = vadd.f32 %v625, %v618
    %v627 = vadd.f32 %v626, %v619
    %628 = vadd.xlane.f32.xlu0 %v627
    %v629 = vpop.xlane.xlu0 %628
    %v630 = vperm.slane %v601, 0
    %v631 = vrcp.pop %v630
    %v632 = vmul.f32 %v630, %v631
    %v633 = vsub.f32 1.0, %v632
    %v634 = vmul.f32 %v631, %v633
    %v635 = vadd.f32 %v631, %v634
    %vm636 = vweird.f32 %v630
    %vm637 = vweird.f32 %v631
    %vm638 = vmor %vm636, %vm637
    %v639 = vsel %vm638, %v631, %v635
    %v640 = vand.u32 2147483647, %v630
    %vm641 = vcmp.eq.f32.partialorder %v640, 8.507059e+37
    %v642 = vand.u32 %v630, 2147483648
    %v643 = vor.u32 1.1754944e-38, %v642
    %v644 = vsel %vm641, %v643, %v639
    %v645 = vmul.f32 %v606, %v644
    %v646 = vmul.f32 %v611, %v644
    %v647 = vmul.f32 %v624, %v644
    %v648 = vmul.f32 %v629, %v644
    %v649 = vmul.f32 %v645, %v645
    %v650 = vmul.f32 %v646, %v646
    %v651 = vsub.f32 %v647, %v649
    %v652 = vsub.f32 %v648, %v650
    %v653 = vld [vmem:[%s7] sm:$0xff]
    %v654 = vld [vmem:[%s7 + $0x8] sm:$0xff]
    %v655 = vadd.f32 %v651, 1e-05
    %v656 = vadd.f32 %v652, 1e-05
    %v657 = vrsqrt.pop %v655
    %v658 = vmul.f32 %v657, %v655
    %v659 = vmul.f32 %v658, %v657
    %v660 = vmul.f32 0.5, %v659
    %v661 = vsub.f32 1.5, %v660
    %v662 = vmul.f32 %v657, %v661
    %vm663 = vweird.f32 %v655
    %vm664 = vweird.f32 %v657
    %vm665 = vmor %vm663, %vm664
    %v666 = vsel %vm665, %v657, %v662
    %v667 = vrsqrt.pop %v656
    %v668 = vmul.f32 %v667, %v656
    %v669 = vmul.f32 %v668, %v667
    %v670 = vmul.f32 0.5, %v669
    %v671 = vsub.f32 1.5, %v670
    %v672 = vmul.f32 %v667, %v671
    %vm673 = vweird.f32 %v656
    %vm674 = vweird.f32 %v667
    %vm675 = vmor %vm673, %vm674
    %v676 = vsel %vm675, %v667, %v672
    %v677 = vmul.f32 %v653, %v666
    %v678 = vmul.f32 %v654, %v676
    %v679 = vld [vmem:[%s8] sm:$0xff]
    %v680 = vld [vmem:[%s8 + $0x8] sm:$0xff]
    %v681 = vmul.f32 %v645, %v677
    %v682 = vmul.f32 %v646, %v678
    %v683 = vsub.f32 %v679, %v681
    %v684 = vsub.f32 %v680, %v682
    %686 = vset.pattern.permute.xlu0 0
    %687 = vperm.xlu0 %686, %v677
    %v688 = vpop.permute.xlu0 %687
    %691 = vset.pattern.permute.xlu0 0
    %692 = vperm.xlu0 %691, %v678
    %v693 = vpop.permute.xlu0 %692
    %v695 = vmul.f32 %v584, %v688
    %v696 = vmul.f32 %v585, %v688
    %v697 = vmul.f32 %v586, %v688
    %v698 = vmul.f32 %v587, %v688
    %v699 = vmul.f32 %v588, %v693
    %v700 = vmul.f32 %v589, %v693
    %v701 = vmul.f32 %v590, %v693
    %v702 = vmul.f32 %v591, %v693
    %704 = vset.pattern.permute.xlu0 0
    %705 = vperm.xlu0 %704, %v683
    %v706 = vpop.permute.xlu0 %705
    %709 = vset.pattern.permute.xlu0 0
    %710 = vperm.xlu0 %709, %v684
    %v711 = vpop.permute.xlu0 %710
    %v713 = vadd.f32 %v695, %v706
    %v714 = vadd.f32 %v696, %v706
    %v715 = vadd.f32 %v697, %v706
    %v716 = vadd.f32 %v698, %v706
    %v717 = vadd.f32 %v699, %v711
    %v718 = vadd.f32 %v700, %v711
    %v719 = vadd.f32 %v701, %v711
    %v720 = vadd.f32 %v702, %v711
    %v721 = vld [vmem:[%s10] sm:$0xff]
    %v722 = vld [vmem:[%s10 + $0x8] sm:$0xff]
    %v723 = vld [vmem:[%s10 + $0x10] sm:$0xff]
    %v724 = vld [vmem:[%s10 + $0x18] sm:$0xff]
    %v725 = vld [vmem:[%s10 + $0x20] sm:$0xff]
    %v726 = vld [vmem:[%s10 + $0x28] sm:$0xff]
    %v727 = vld [vmem:[%s10 + $0x30] sm:$0xff]
    %v728 = vld [vmem:[%s10 + $0x38] sm:$0xff]
    %v729 = vld [vmem:[%s10 + $0x40] sm:$0xff]
    %v730 = vld [vmem:[%s10 + $0x48] sm:$0xff]
    %v731 = vld [vmem:[%s10 + $0x50] sm:$0xff]
    %v732 = vld [vmem:[%s10 + $0x58] sm:$0xff]
    %v733 = vld [vmem:[%s10 + $0x60] sm:$0xff]
    %v734 = vld [vmem:[%s10 + $0x68] sm:$0xff]
    %v735 = vld [vmem:[%s10 + $0x70] sm:$0xff]
    %v736 = vld [vmem:[%s10 + $0x78] sm:$0xff]
    %v737 = vld [vmem:[%s10 + $0x80] sm:$0xff]
    %v738 = vld [vmem:[%s10 + $0x88] sm:$0xff]
    %v739 = vld [vmem:[%s10 + $0x90] sm:$0xff]
    %v740 = vld [vmem:[%s10 + $0x98] sm:$0xff]
    %v741 = vld [vmem:[%s10 + $0xa0] sm:$0xff]
    %v742 = vld [vmem:[%s10 + $0xa8] sm:$0xff]
    %v743 = vld [vmem:[%s10 + $0xb0] sm:$0xff]
    %v744 = vld [vmem:[%s10 + $0xb8] sm:$0xff]
    %v745 = vld [vmem:[%s10 + $0xc0] sm:$0xff]
    %v746 = vld [vmem:[%s10 + $0xc8] sm:$0xff]
    %v747 = vld [vmem:[%s10 + $0xd0] sm:$0xff]
    %v748 = vld [vmem:[%s10 + $0xd8] sm:$0xff]
    %v749 = vld [vmem:[%s10 + $0xe0] sm:$0xff]
    %v750 = vld [vmem:[%s10 + $0xe8] sm:$0xff]
    %v751 = vld [vmem:[%s10 + $0xf0] sm:$0xff]
    %v752 = vld [vmem:[%s10 + $0xf8] sm:$0xff]
    %v753 = vld [vmem:[%s10 + $0x100] sm:$0xff]
    %v754 = vld [vmem:[%s10 + $0x108] sm:$0xff]
    %v755 = vld [vmem:[%s10 + $0x110] sm:$0xff]
    %v756 = vld [vmem:[%s10 + $0x118] sm:$0xff]
    %v757 = vld [vmem:[%s10 + $0x120] sm:$0xff]
    %v758 = vld [vmem:[%s10 + $0x128] sm:$0xff]
    %v759 = vld [vmem:[%s10 + $0x130] sm:$0xff]
    %v760 = vld [vmem:[%s10 + $0x138] sm:$0xff]
    %v761 = vld [vmem:[%s10 + $0x140] sm:$0xff]
    %v762 = vld [vmem:[%s10 + $0x148] sm:$0xff]
    %v763 = vld [vmem:[%s10 + $0x150] sm:$0xff]
    %v764 = vld [vmem:[%s10 + $0x158] sm:$0xff]
    %v765 = vld [vmem:[%s10 + $0x160] sm:$0xff]
    %v766 = vld [vmem:[%s10 + $0x168] sm:$0xff]
    %v767 = vld [vmem:[%s10 + $0x170] sm:$0xff]
    %v768 = vld [vmem:[%s10 + $0x178] sm:$0xff]
    %v769 = vld [vmem:[%s10 + $0x180] sm:$0xff]
    %v770 = vld [vmem:[%s10 + $0x188] sm:$0xff]
    %v771 = vld [vmem:[%s10 + $0x190] sm:$0xff]
    %v772 = vld [vmem:[%s10 + $0x198] sm:$0xff]
    %v773 = vld [vmem:[%s10 + $0x1a0] sm:$0xff]
    %v774 = vld [vmem:[%s10 + $0x1a8] sm:$0xff]
    %v775 = vld [vmem:[%s10 + $0x1b0] sm:$0xff]
    %v776 = vld [vmem:[%s10 + $0x1b8] sm:$0xff]
    %v777 = vld [vmem:[%s10 + $0x1c0] sm:$0xff]
    %v778 = vld [vmem:[%s10 + $0x1c8] sm:$0xff]
    %v779 = vld [vmem:[%s10 + $0x1d0] sm:$0xff]
    %v780 = vld [vmem:[%s10 + $0x1d8] sm:$0xff]
    %v781 = vld [vmem:[%s10 + $0x1e0] sm:$0xff]
    %v782 = vld [vmem:[%s10 + $0x1e8] sm:$0xff]
    %v783 = vld [vmem:[%s10 + $0x1f0] sm:$0xff]
    %v784 = vld [vmem:[%s10 + $0x1f8] sm:$0xff]
    %785 = vmatpush.msra.mxu0 %v736
    %786 = vmatpush.msra.mxu0 %v735
    %787 = vmatpush.msra.mxu0 %v734
    %788 = vmatpush.msra.mxu0 %v733
    %789 = vmatpush.msra.mxu0 %v732
    %790 = vmatpush.msra.mxu0 %v731
    %791 = vmatpush.msra.mxu0 %v730
    %792 = vmatpush.msra.mxu0 %v729
    %793 = vmatpush.msra.mxu0 %v728
    %794 = vmatpush.msra.mxu0 %v727
    %795 = vmatpush.msra.mxu0 %v726
    %796 = vmatpush.msra.mxu0 %v725
    %797 = vmatpush.msra.mxu0 %v724
    %798 = vmatpush.msra.mxu0 %v723
    %799 = vmatpush.msra.mxu0 %v722
    %800 = vmatpush.msra.mxu0 %v721
    %801 = vmatmul.f32.gmra.mxu0 %v713
    %v802 = vpop.f32.mrf.mxu0
    %v803 = vadd.f32 0.0, %v802
    %804 = vmatmul.f32.gmra.mxu0 %v717
    %v805 = vpop.f32.mrf.mxu0
    %v806 = vadd.f32 0.0, %v805
    %807 = vdwg.mxu0
    %808 = vmatpush.msra.mxu0 %v752
    %809 = vmatpush.msra.mxu0 %v751
    %810 = vmatpush.msra.mxu0 %v750
    %811 = vmatpush.msra.mxu0 %v749
    %812 = vmatpush.msra.mxu0 %v748
    %813 = vmatpush.msra.mxu0 %v747
    %814 = vmatpush.msra.mxu0 %v746
    %815 = vmatpush.msra.mxu0 %v745
    %816 = vmatpush.msra.mxu0 %v744
    %817 = vmatpush.msra.mxu0 %v743
    %818 = vmatpush.msra.mxu0 %v742
    %819 = vmatpush.msra.mxu0 %v741
    %820 = vmatpush.msra.mxu0 %v740
    %821 = vmatpush.msra.mxu0 %v739
    %822 = vmatpush.msra.mxu0 %v738
    %823 = vmatpush.msra.mxu0 %v737
    %824 = vmatmul.f32.gmra.mxu0 %v714
    %v825 = vpop.f32.mrf.mxu0
    %v826 = vadd.f32 %v803, %v825
    %827 = vmatmul.f32.gmra.mxu0 %v718
    %v828 = vpop.f32.mrf.mxu0
    %v829 = vadd.f32 %v806, %v828
    %830 = vdwg.mxu0
    %831 = vmatpush.msra.mxu0 %v768
    %832 = vmatpush.msra.mxu0 %v767
    %833 = vmatpush.msra.mxu0 %v766
    %834 = vmatpush.msra.mxu0 %v765
    %835 = vmatpush.msra.mxu0 %v764
    %836 = vmatpush.msra.mxu0 %v763
    %837 = vmatpush.msra.mxu0 %v762
    %838 = vmatpush.msra.mxu0 %v761
    %839 = vmatpush.msra.mxu0 %v760
    %840 = vmatpush.msra.mxu0 %v759
    %841 = vmatpush.msra.mxu0 %v758
    %842 = vmatpush.msra.mxu0 %v757
    %843 = vmatpush.msra.mxu0 %v756
    %844 = vmatpush.msra.mxu0 %v755
    %845 = vmatpush.msra.mxu0 %v754
    %846 = vmatpush.msra.mxu0 %v753
    %847 = vmatmul.f32.gmra.mxu0 %v715
    %v848 = vpop.f32.mrf.mxu0
    %v849 = vadd.f32 %v826, %v848
    %850 = vmatmul.f32.gmra.mxu0 %v719
    %v851 = vpop.f32.mrf.mxu0
    %v852 = vadd.f32 %v829, %v851
    %853 = vdwg.mxu0
    %854 = vmatpush.msra.mxu0 %v784
    %855 = vmatpush.msra.mxu0 %v783
    %856 = vmatpush.msra.mxu0 %v782
    %857 = vmatpush.msra.mxu0 %v781
    %858 = vmatpush.msra.mxu0 %v780
    %859 = vmatpush.msra.mxu0 %v779
    %860 = vmatpush.msra.mxu0 %v778
    %861 = vmatpush.msra.mxu0 %v777
    %862 = vmatpush.msra.mxu0 %v776
    %863 = vmatpush.msra.mxu0 %v775
    %864 = vmatpush.msra.mxu0 %v774
    %865 = vmatpush.msra.mxu0 %v773
    %866 = vmatpush.msra.mxu0 %v772
    %867 = vmatpush.msra.mxu0 %v771
    %868 = vmatpush.msra.mxu0 %v770
    %869 = vmatpush.msra.mxu0 %v769
    %870 = vmatmul.f32.gmra.mxu0 %v716
    %v871 = vpop.f32.mrf.mxu0
    %v872 = vadd.f32 %v849, %v871
    %873 = vmatmul.f32.gmra.mxu0 %v720
    %v874 = vpop.f32.mrf.mxu0
    %v875 = vadd.f32 %v852, %v874
    %876 = vdwg.mxu0
    %879 = vrot.lane.b32.xlu0 %v872, 84
    %v880 = vpop.permute.xlu0 %879
    %881 = vrot.lane.b32.xlu0 %v875, 84
    %v882 = vpop.permute.xlu0 %881
    %v885 = vld [vmem:[%s11] sm:$0xff]
    %v886 = vld [vmem:[%s11 + $0x8] sm:$0xff]
    %v887 = vld [vmem:[%s11 + $0x10] sm:$0xff]
    %v888 = vld [vmem:[%s11 + $0x18] sm:$0xff]
    %v889 = vld [vmem:[%s12] sm:$0xff]
    %v890 = vld [vmem:[%s12 + $0x8] sm:$0xff]
    %v891 = vld [vmem:[%s12 + $0x10] sm:$0xff]
    %v892 = vld [vmem:[%s12 + $0x18] sm:$0xff]
    %894 = vset.pattern.permute.xlu0 0
    %895 = vperm.xlu0 %894, %v889
    %v896 = vpop.permute.xlu0 %895
    %899 = vset.pattern.permute.xlu0 0
    %900 = vperm.xlu0 %899, %v890
    %v901 = vpop.permute.xlu0 %900
    %904 = vset.pattern.permute.xlu0 0
    %905 = vperm.xlu0 %904, %v891
    %v906 = vpop.permute.xlu0 %905
    %909 = vset.pattern.permute.xlu0 0
    %910 = vperm.xlu0 %909, %v892
    %v911 = vpop.permute.xlu0 %910
    %vm913 = vcmask 261120
    %v915 = vsel %vm913, %v885, 0
    %v918 = vsel %vm913, %v886, 0
    %v921 = vsel %vm913, %v887, 0
    %v924 = vsel %vm913, %v888, 0
    %926 = vmatpush.msra.mxu0 0.0
    %927 = vmatpush.msra.mxu0 0.0
    %928 = vmatpush.msra.mxu0 0.0
    %929 = vmatpush.msra.mxu0 0.0
    %930 = vmatpush.msra.mxu0 0.0
    %931 = vmatpush.msra.mxu0 0.0
    %932 = vmatpush.msra.mxu0 0.0
    %933 = vmatpush.msra.mxu0 0.0
    %934 = vmatpush.msra.mxu0 0.0
    %935 = vmatpush.msra.mxu0 0.0
    %936 = vmatpush.msra.mxu0 0.0
    %937 = vmatpush.msra.mxu0 0.0
    %938 = vmatpush.msra.mxu0 %v882
    %939 = vmatpush.msra.mxu0 %v880
    %940 = vmatpush.msra.mxu0 %v875
    %941 = vmatpush.msra.mxu0 %v872
    %942 = vmatmul.f32.gmra.mxu0 %v915
    %v943 = vpop.f32.mrf.mxu0
    %v944 = vadd.f32 %v896, %v943
    %945 = vmatmul.f32.gmra.mxu0 %v918
    %v946 = vpop.f32.mrf.mxu0
    %v947 = vadd.f32 %v901, %v946
    %948 = vmatmul.f32.gmra.mxu0 %v921
    %v949 = vpop.f32.mrf.mxu0
    %v950 = vadd.f32 %v906, %v949
    %951 = vmatmul.f32.gmra.mxu0 %v924
    %v952 = vpop.f32.mrf.mxu0
    %v953 = vadd.f32 %v911, %v952
    %954 = vdwg.mxu0
    %vm955 = vcmp.gt.f32.partialorder %v944, 0.0
    %vm956 = vcmp.gt.f32.partialorder %v947, 0.0
    %vm957 = vcmp.gt.f32.partialorder %v950, 0.0
    %vm958 = vcmp.gt.f32.partialorder %v953, 0.0
    %v959 = vmin.f32 %v944, 0.0
    %v960 = vmin.f32 %v947, 0.0
    %v961 = vmin.f32 %v950, 0.0
    %v962 = vmin.f32 %v953, 0.0
    %v963 = vmul.f32 %v959, 1.442695
    %v964 = vpow.pop %v963
    %v965 = vmul.f32 %v960, 1.442695
    %v966 = vpow.pop %v965
    %v967 = vmul.f32 %v961, 1.442695
    %v968 = vpow.pop %v967
    %v969 = vmul.f32 %v962, 1.442695
    %v970 = vpow.pop %v969
    %v971 = vsub.f32 %v964, 1.0
    %v972 = vsub.f32 %v966, 1.0
    %v973 = vsub.f32 %v968, 1.0
    %v974 = vsub.f32 %v970, 1.0
    %v975 = vmul.f32 %v971, 1.6732632
    %v976 = vmul.f32 %v972, 1.6732632
    %v977 = vmul.f32 %v973, 1.6732632
    %v978 = vmul.f32 %v974, 1.6732632
    %v979 = vsel %vm955, %v944, %v975
    %v980 = vsel %vm956, %v947, %v976
    %v981 = vsel %vm957, %v950, %v977
    %v982 = vsel %vm958, %v953, %v978
    %v983 = vmul.f32 %v979, 1.050701
    %v984 = vmul.f32 %v980, 1.050701
    %v985 = vmul.f32 %v981, 1.050701
    %v986 = vmul.f32 %v982, 1.050701
    %v987 = vld [vmem:[%s15] sm:$0x1]
    %v989 = vperm.slane %v987, 0
    %v991 = vmul.f32 %v983, %v989
    %v992 = vmul.f32 %v984, %v989
    %v993 = vmul.f32 %v985, %v989
    %v994 = vmul.f32 %v986, %v989
    %vm995 = vcmask 352256
    %v996 = vsel %vm995, %v987, 0.0
    %997 = vadd.xlane.f32.xlu0 %v996
    %v998 = vpop.xlane.xlu0 %997
    %vm999 = vcmask 359424
    %v1000 = vsel %vm999, %v991, 0.0
    %1001 = vadd.xlane.f32.xlu0 %v1000
    %v1002 = vpop.xlane.xlu0 %1001
    %v1003 = vsel %vm999, %v992, 0.0
    %1004 = vadd.xlane.f32.xlu0 %v1003
    %v1005 = vpop.xlane.xlu0 %1004
    %v1006 = vsel %vm999, %v993, 0.0
    %1007 = vadd.xlane.f32.xlu0 %v1006
    %v1008 = vpop.xlane.xlu0 %1007
    %v1009 = vsel %vm999, %v994, 0.0
    %1010 = vadd.xlane.f32.xlu0 %v1009
    %v1011 = vpop.xlane.xlu0 %1010
    %v1012 = vmul.f32 %v991, %v991
    %v1013 = vmul.f32 %v992, %v992
    %v1014 = vmul.f32 %v993, %v993
    %v1015 = vmul.f32 %v994, %v994
    %v1016 = vsel %vm999, %v1012, 0.0
    %1017 = vadd.xlane.f32.xlu0 %v1016
    %v1018 = vpop.xlane.xlu0 %1017
    %v1019 = vsel %vm999, %v1013, 0.0
    %1020 = vadd.xlane.f32.xlu0 %v1019
    %v1021 = vpop.xlane.xlu0 %1020
    %v1022 = vsel %vm999, %v1014, 0.0
    %1023 = vadd.xlane.f32.xlu0 %v1022
    %v1024 = vpop.xlane.xlu0 %1023
    %v1025 = vsel %vm999, %v1015, 0.0
    %1026 = vadd.xlane.f32.xlu0 %v1025
    %v1027 = vpop.xlane.xlu0 %1026
    %v1028 = vperm.slane %v998, 0
    %v1029 = vrcp.pop %v1028
    %v1030 = vmul.f32 %v1028, %v1029
    %v1031 = vsub.f32 1.0, %v1030
    %v1032 = vmul.f32 %v1029, %v1031
    %v1033 = vadd.f32 %v1029, %v1032
    %vm1034 = vweird.f32 %v1028
    %vm1035 = vweird.f32 %v1029
    %vm1036 = vmor %vm1034, %vm1035
    %v1037 = vsel %vm1036, %v1029, %v1033
    %v1038 = vand.u32 2147483647, %v1028
    %vm1039 = vcmp.eq.f32.partialorder %v1038, 8.507059e+37
    %v1040 = vand.u32 %v1028, 2147483648
    %v1041 = vor.u32 1.1754944e-38, %v1040
    %v1042 = vsel %vm1039, %v1041, %v1037
    %v1043 = vmul.f32 %v1002, %v1042
    %v1044 = vmul.f32 %v1005, %v1042
    %v1045 = vmul.f32 %v1008, %v1042
    %v1046 = vmul.f32 %v1011, %v1042
    %v1047 = vmul.f32 %v1018, %v1042
    %v1048 = vmul.f32 %v1021, %v1042
    %v1049 = vmul.f32 %v1024, %v1042
    %v1050 = vmul.f32 %v1027, %v1042
    %v1051 = vmul.f32 %v1043, %v1043
    %v1052 = vmul.f32 %v1044, %v1044
    %v1053 = vmul.f32 %v1045, %v1045
    %v1054 = vmul.f32 %v1046, %v1046
    %v1055 = vsub.f32 %v1047, %v1051
    %v1056 = vsub.f32 %v1048, %v1052
    %v1057 = vsub.f32 %v1049, %v1053
    %v1058 = vsub.f32 %v1050, %v1054
    %v1059 = vld [vmem:[%s13] sm:$0xff]
    %v1060 = vld [vmem:[%s13 + $0x8] sm:$0xff]
    %v1061 = vld [vmem:[%s13 + $0x10] sm:$0xff]
    %v1062 = vld [vmem:[%s13 + $0x18] sm:$0xff]
    %v1063 = vadd.f32 %v1055, 1e-05
    %v1064 = vadd.f32 %v1056, 1e-05
    %v1065 = vadd.f32 %v1057, 1e-05
    %v1066 = vadd.f32 %v1058, 1e-05
    %v1067 = vrsqrt.pop %v1063
    %v1068 = vmul.f32 %v1067, %v1063
    %v1069 = vmul.f32 %v1068, %v1067
    %v1070 = vmul.f32 0.5, %v1069
    %v1071 = vsub.f32 1.5, %v1070
    %v1072 = vmul.f32 %v1067, %v1071
    %vm1073 = vweird.f32 %v1063
    %vm1074 = vweird.f32 %v1067
    %vm1075 = vmor %vm1073, %vm1074
    %v1076 = vsel %vm1075, %v1067, %v1072
    %v1077 = vrsqrt.pop %v1064
    %v1078 = vmul.f32 %v1077, %v1064
    %v1079 = vmul.f32 %v1078, %v1077
    %v1080 = vmul.f32 0.5, %v1079
    %v1081 = vsub.f32 1.5, %v1080
    %v1082 = vmul.f32 %v1077, %v1081
    %vm1083 = vweird.f32 %v1064
    %vm1084 = vweird.f32 %v1077
    %vm1085 = vmor %vm1083, %vm1084
    %v1086 = vsel %vm1085, %v1077, %v1082
    %v1087 = vrsqrt.pop %v1065
    %v1088 = vmul.f32 %v1087, %v1065
    %v1089 = vmul.f32 %v1088, %v1087
    %v1090 = vmul.f32 0.5, %v1089
    %v1091 = vsub.f32 1.5, %v1090
    %v1092 = vmul.f32 %v1087, %v1091
    %vm1093 = vweird.f32 %v1065
    %vm1094 = vweird.f32 %v1087
    %vm1095 = vmor %vm1093, %vm1094
    %v1096 = vsel %vm1095, %v1087, %v1092
    %v1097 = vrsqrt.pop %v1066
    %v1098 = vmul.f32 %v1097, %v1066
    %v1099 = vmul.f32 %v1098, %v1097
    %v1100 = vmul.f32 0.5, %v1099
    %v1101 = vsub.f32 1.5, %v1100
    %v1102 = vmul.f32 %v1097, %v1101
    %vm1103 = vweird.f32 %v1066
    %vm1104 = vweird.f32 %v1097
    %vm1105 = vmor %vm1103, %vm1104
    %v1106 = vsel %vm1105, %v1097, %v1102
    %v1107 = vmul.f32 %v1059, %v1076
    %v1108 = vmul.f32 %v1060, %v1086
    %v1109 = vmul.f32 %v1061, %v1096
    %v1110 = vmul.f32 %v1062, %v1106
    %v1111 = vld [vmem:[%s14] sm:$0xff]
    %v1112 = vld [vmem:[%s14 + $0x8] sm:$0xff]
    %v1113 = vld [vmem:[%s14 + $0x10] sm:$0xff]
    %v1114 = vld [vmem:[%s14 + $0x18] sm:$0xff]
    %v1115 = vmul.f32 %v1043, %v1107
    %v1116 = vmul.f32 %v1044, %v1108
    %v1117 = vmul.f32 %v1045, %v1109
    %v1118 = vmul.f32 %v1046, %v1110
    %v1119 = vsub.f32 %v1111, %v1115
    %v1120 = vsub.f32 %v1112, %v1116
    %v1121 = vsub.f32 %v1113, %v1117
    %v1122 = vsub.f32 %v1114, %v1118
    %1124 = vset.pattern.permute.xlu0 0
    %1125 = vperm.xlu0 %1124, %v1107
    %v1126 = vpop.permute.xlu0 %1125
    %1129 = vset.pattern.permute.xlu0 0
    %1130 = vperm.xlu0 %1129, %v1108
    %v1131 = vpop.permute.xlu0 %1130
    %1134 = vset.pattern.permute.xlu0 0
    %1135 = vperm.xlu0 %1134, %v1109
    %v1136 = vpop.permute.xlu0 %1135
    %1139 = vset.pattern.permute.xlu0 0
    %1140 = vperm.xlu0 %1139, %v1110
    %v1141 = vpop.permute.xlu0 %1140
    %v1143 = vmul.f32 %v991, %v1126
    %v1144 = vmul.f32 %v992, %v1131
    %v1145 = vmul.f32 %v993, %v1136
    %v1146 = vmul.f32 %v994, %v1141
    %1148 = vset.pattern.permute.xlu0 0
    %1149 = vperm.xlu0 %1148, %v1119
    %v1150 = vpop.permute.xlu0 %1149
    %1153 = vset.pattern.permute.xlu0 0
    %1154 = vperm.xlu0 %1153, %v1120
    %v1155 = vpop.permute.xlu0 %1154
    %1158 = vset.pattern.permute.xlu0 0
    %1159 = vperm.xlu0 %1158, %v1121
    %v1160 = vpop.permute.xlu0 %1159
    %1163 = vset.pattern.permute.xlu0 0
    %1164 = vperm.xlu0 %1163, %v1122
    %v1165 = vpop.permute.xlu0 %1164
    %v1167 = vadd.f32 %v1143, %v1150
    %v1168 = vadd.f32 %v1144, %v1155
    %v1169 = vadd.f32 %v1145, %v1160
    %v1170 = vadd.f32 %v1146, %v1165
    %v1171 = vld [vmem:[%s16] sm:$0xff]
    %v1172 = vld [vmem:[%s16 + $0x8] sm:$0xff]
    %v1173 = vld [vmem:[%s16 + $0x10] sm:$0xff]
    %v1174 = vld [vmem:[%s16 + $0x18] sm:$0xff]
    %v1175 = vld [vmem:[%s16 + $0x20] sm:$0xff]
    %v1176 = vld [vmem:[%s16 + $0x28] sm:$0xf]
    %v1178 = vsel %vm999, %v1167, 0
    %v1181 = vsel %vm999, %v1168, 0
    %v1184 = vsel %vm999, %v1169, 0
    %v1187 = vsel %vm999, %v1170, 0
    %vm1189 = vcmask 1043456
    %v1191 = vsel %vm1189, %v1176, 0
    %1193 = vmatpush.msra.mxu0 0.0
    %1194 = vmatpush.msra.mxu0 0.0
    %1195 = vmatpush.msra.mxu0 0.0
    %1196 = vmatpush.msra.mxu0 0.0
    %1197 = vmatpush.msra.mxu0 0.0
    %1198 = vmatpush.msra.mxu0 0.0
    %1199 = vmatpush.msra.mxu0 0.0
    %1200 = vmatpush.msra.mxu0 0.0
    %1201 = vmatpush.msra.mxu0 0.0
    %1202 = vmatpush.msra.mxu0 0.0
    %1203 = vmatpush.msra.mxu0 %v1191
    %1204 = vmatpush.msra.mxu0 %v1175
    %1205 = vmatpush.msra.mxu0 %v1174
    %1206 = vmatpush.msra.mxu0 %v1173
    %1207 = vmatpush.msra.mxu0 %v1172
    %1208 = vmatpush.msra.mxu0 %v1171
    %1209 = vmatmul.f32.gmra.mxu0 %v1178
    %v1210 = vpop.f32.mrf.mxu0
    %v1211 = vadd.f32 0.0, %v1210
    %1212 = vmatmul.f32.gmra.mxu0 %v1181
    %v1213 = vpop.f32.mrf.mxu0
    %v1214 = vadd.f32 0.0, %v1213
    %1215 = vmatmul.f32.gmra.mxu0 %v1184
    %v1216 = vpop.f32.mrf.mxu0
    %v1217 = vadd.f32 0.0, %v1216
    %1218 = vmatmul.f32.gmra.mxu0 %v1187
    %v1219 = vpop.f32.mrf.mxu0
    %v1220 = vadd.f32 0.0, %v1219
    %1221 = vdwg.mxu0
    %1222 = vxpose.xlu0.b32.start [1/16] %v1211, 128
    %1223 = vxpose.xlu0.b32.cont [2/16] %v1214, 128
    %1224 = vxpose.xlu0.b32.cont [3/16] %v1217, 128
    %1225 = vxpose.xlu0.b32.cont [4/16] %v1220, 128
    %1226 = vxpose.xlu0.b32.cont [5/16] 0.0, 128
    %1227 = vxpose.xlu0.b32.cont [6/16] 0.0, 128
    %1228 = vxpose.xlu0.b32.cont [7/16] 0.0, 128
    %1229 = vxpose.xlu0.b32.cont [8/16] 0.0, 128
    %1230 = vxpose.xlu0.b32.cont [9/16] 0.0, 128
    %1231 = vxpose.xlu0.b32.cont [10/16] 0.0, 128
    %1232 = vxpose.xlu0.b32.cont [11/16] 0.0, 128
    %1233 = vxpose.xlu0.b32.cont [12/16] 0.0, 128
    %1234 = vxpose.xlu0.b32.cont [13/16] 0.0, 128
    %1235 = vxpose.xlu0.b32.cont [14/16] 0.0, 128
    %1236 = vxpose.xlu0.b32.cont [15/16] 0.0, 128
    %1237 = vxpose.xlu0.b32.end [16/16] 0.0, 128
    %v1238 = vpop.trf.xlu0
    %v1239 = vpop.trf.xlu0
    %v1240 = vpop.trf.xlu0
    %v1241 = vpop.trf.xlu0
    %v1242 = vpop.trf.xlu0
    %v1243 = vpop.trf.xlu0
    %v1244 = vpop.trf.xlu0
    %v1245 = vpop.trf.xlu0
    %v1246 = vpop.trf.xlu0
    %v1247 = vpop.trf.xlu0
    %v1248 = vpop.trf.xlu0
    %v1249 = vpop.trf.xlu0
    %v1250 = vpop.trf.xlu0
    %v1251 = vpop.trf.xlu0
    %v1252 = vpop.trf.xlu0
    %v1253 = vpop.trf.xlu0
    %v1255 = vrot.slane %v1238, 2
    %1256 = vrot.lane.b32.xlu0 %v1255, 32
    %v1257 = vpop.permute.xlu0 %1256
    %v1259 = vrot.slane %v1238, 4
    %1260 = vrot.lane.b32.xlu0 %v1259, 64
    %v1261 = vpop.permute.xlu0 %1260
    %v1263 = vrot.slane %v1238, 6
    %1264 = vrot.lane.b32.xlu0 %v1263, 96
    %v1265 = vpop.permute.xlu0 %1264
    %v1268 = vrot.slane %v1239, 2
    %1269 = vrot.lane.b32.xlu0 %v1268, 32
    %v1270 = vpop.permute.xlu0 %1269
    %v1272 = vrot.slane %v1239, 4
    %1273 = vrot.lane.b32.xlu0 %v1272, 64
    %v1274 = vpop.permute.xlu0 %1273
    %v1276 = vsel %vm913, %v1238, %v1257
    %vm1277 = vcmask 523264
    %v1278 = vsel %vm1277, %v1276, %v1261
    %vm1279 = vcmask 785408
    %v1280 = vsel %vm1279, %v1278, %v1265
    %v1281 = vsel %vm913, %v1239, %v1270
    %v1282 = vsel %vm1277, %v1281, %v1274
    %v1283 = vld [vmem:[%s17] sm:$0xff]
    %v1284 = vld [vmem:[%s17 + $0x8] sm:$0xff]
    %v1285 = vld [vmem:[%s17 + $0x10] sm:$0xff]
    %v1286 = vld [vmem:[%s17 + $0x18] sm:$0xff]
    %v1287 = vld [vmem:[%s17 + $0x20] sm:$0xff]
    %v1288 = vld [vmem:[%s17 + $0x28] sm:$0xff]
    %v1289 = vld [vmem:[%s17 + $0x30] sm:$0xff]
    %v1290 = vld [vmem:[%s17 + $0x38] sm:$0xff]
    %v1291 = vld [vmem:[%s17 + $0x40] sm:$0xff]
    %v1292 = vld [vmem:[%s17 + $0x48] sm:$0xff]
    %v1293 = vld [vmem:[%s17 + $0x50] sm:$0xff]
    %v1294 = vld [vmem:[%s17 + $0x58] sm:$0xff]
    %v1295 = vld [vmem:[%s17 + $0x60] sm:$0xff]
    %v1296 = vld [vmem:[%s17 + $0x68] sm:$0xff]
    %v1297 = vld [vmem:[%s17 + $0x70] sm:$0xff]
    %v1298 = vld [vmem:[%s17 + $0x78] sm:$0xff]
    %v1299 = vld [vmem:[%s17 + $0x80] sm:$0xff]
    %v1300 = vld [vmem:[%s17 + $0x88] sm:$0xff]
    %v1301 = vld [vmem:[%s17 + $0x90] sm:$0xff]
    %v1302 = vld [vmem:[%s17 + $0x98] sm:$0xff]
    %v1303 = vld [vmem:[%s17 + $0xa0] sm:$0xff]
    %v1304 = vld [vmem:[%s17 + $0xa8] sm:$0xff]
    %v1305 = vld [vmem:[%s17 + $0xb0] sm:$0xff]
    %v1306 = vld [vmem:[%s17 + $0xb8] sm:$0xff]
    %v1307 = vld [vmem:[%s17 + $0xc0] sm:$0xff]
    %v1308 = vld [vmem:[%s17 + $0xc8] sm:$0xff]
    %v1309 = vld [vmem:[%s17 + $0xd0] sm:$0xff]
    %v1310 = vld [vmem:[%s17 + $0xd8] sm:$0xff]
    %v1311 = vld [vmem:[%s18] sm:$0x1]
    %v1313 = vperm.slane %v1311, 0
    %v1316 = vsel %vm1279, %v1282, 0
    %1318 = vmatpush.msra.mxu0 %v1298
    %1319 = vmatpush.msra.mxu0 %v1297
    %1320 = vmatpush.msra.mxu0 %v1296
    %1321 = vmatpush.msra.mxu0 %v1295
    %1322 = vmatpush.msra.mxu0 %v1294
    %1323 = vmatpush.msra.mxu0 %v1293
    %1324 = vmatpush.msra.mxu0 %v1292
    %1325 = vmatpush.msra.mxu0 %v1291
    %1326 = vmatpush.msra.mxu0 %v1290
    %1327 = vmatpush.msra.mxu0 %v1289
    %1328 = vmatpush.msra.mxu0 %v1288
    %1329 = vmatpush.msra.mxu0 %v1287
    %1330 = vmatpush.msra.mxu0 %v1286
    %1331 = vmatpush.msra.mxu0 %v1285
    %1332 = vmatpush.msra.mxu0 %v1284
    %1333 = vmatpush.msra.mxu0 %v1283
    %1334 = vmatmul.f32.gmra.mxu0 %v1280
    %v1335 = vpop.f32.mrf.mxu0
    %v1336 = vadd.f32 %v1313, %v1335
    %1337 = vdwg.mxu0
    %1338 = vmatpush.msra.mxu0 0.0
    %1339 = vmatpush.msra.mxu0 0.0
    %1340 = vmatpush.msra.mxu0 0.0
    %1341 = vmatpush.msra.mxu0 0.0
    %1342 = vmatpush.msra.mxu0 %v1310
    %1343 = vmatpush.msra.mxu0 %v1309
    %1344 = vmatpush.msra.mxu0 %v1308
    %1345 = vmatpush.msra.mxu0 %v1307
    %1346 = vmatpush.msra.mxu0 %v1306
    %1347 = vmatpush.msra.mxu0 %v1305
    %1348 = vmatpush.msra.mxu0 %v1304
    %1349 = vmatpush.msra.mxu0 %v1303
    %1350 = vmatpush.msra.mxu0 %v1302
    %1351 = vmatpush.msra.mxu0 %v1301
    %1352 = vmatpush.msra.mxu0 %v1300
    %1353 = vmatpush.msra.mxu0 %v1299
    %1354 = vmatmul.f32.gmra.mxu0 %v1316
    %v1355 = vpop.f32.mrf.mxu0
    %v1356 = vadd.f32 %v1336, %v1355
    %1357 = vdwg.mxu0
    %v1358 = vld [vmem:[%s19] sm:$0xff]
    %v1359 = vld [vmem:[%s19 + $0x8] sm:$0xff]
    %v1360 = vld [vmem:[%s19 + $0x10] sm:$0xff]
    %v1361 = vld [vmem:[%s19 + $0x18] sm:$0xff]
    %v1362 = vld [vmem:[%s19 + $0x20] sm:$0xff]
    %v1363 = vld [vmem:[%s20] sm:$0x1]
    %v1365 = vperm.slane %v1363, 0
    %vm1367 = vcmask 326656
    %v1369 = vsel %vm1367, %v1356, 0
    %1371 = vmatpush.msra.mxu0 0.0
    %1372 = vmatpush.msra.mxu0 0.0
    %1373 = vmatpush.msra.mxu0 0.0
    %1374 = vmatpush.msra.mxu0 0.0
    %1375 = vmatpush.msra.mxu0 0.0
    %1376 = vmatpush.msra.mxu0 0.0
    %1377 = vmatpush.msra.mxu0 0.0
    %1378 = vmatpush.msra.mxu0 0.0
    %1379 = vmatpush.msra.mxu0 0.0
    %1380 = vmatpush.msra.mxu0 0.0
    %1381 = vmatpush.msra.mxu0 0.0
    %1382 = vmatpush.msra.mxu0 %v1362
    %1383 = vmatpush.msra.mxu0 %v1361
    %1384 = vmatpush.msra.mxu0 %v1360
    %1385 = vmatpush.msra.mxu0 %v1359
    %1386 = vmatpush.msra.mxu0 %v1358
    %1387 = vmatmul.f32.gmra.mxu0 %v1369
    %v1388 = vpop.f32.mrf.mxu0
    %v1389 = vadd.f32 %v1365, %v1388
    %1390 = vdwg.mxu0
    %v1391 = vld [vmem:[%s21] sm:$0x3]
    %vm1392 = vcmp.gt.f32.partialorder %v1391, 0.5
    %v1394 = vrot.slane %v1389, 1
    %v1395 = vsel %vm1392, 1, 0
    %vm1396 = vcmp.eq.s32.totalorder %v1395, 1
    %v1397 = vperm.slane %v1389, 0
    %v1398 = vperm.slane %v1394, 0
    %v1401 = vsel %vm1396, %v1397, -inf
    %v1402 = vsel %vm1396, %v1398, -inf
    %vm1403 = vcmask 156672
    %v1404 = vsel %vm1403, %v1401, -inf
    %1405 = vmax.xlane.f32.xlu0 %v1404
    %v1406 = vpop.xlane.xlu0 %1405
    %v1407 = vsel %vm1403, %v1402, -inf
    %1408 = vmax.xlane.f32.xlu0 %v1407
    %v1409 = vpop.xlane.xlu0 %1408
    %v1410 = vmul.f32 %v1406, %v1391
    %v1411 = vmul.f32 %v1409, %v1391
    %v1412 = vsel %vm1403, %v1410, 0.0
    %v1413 = vrot.slane %v1412, 4
    %v1414 = vadd.f32 %v1412, %v1413
    %v1415 = vrot.slane %v1414, 2
    %v1416 = vadd.f32 %v1414, %v1415
    %v1417 = vrot.slane %v1416, 1
    %v1418 = vadd.f32 %v1416, %v1417
    %v1419 = vsel %vm1403, %v1411, 0.0
    %v1420 = vrot.slane %v1419, 4
    %v1421 = vadd.f32 %v1419, %v1420
    %v1422 = vrot.slane %v1421, 2
    %v1423 = vadd.f32 %v1421, %v1422
    %v1424 = vrot.slane %v1423, 1
    %v1425 = vadd.f32 %v1423, %v1424
    %vm1428 = vcmask 1041409
    %v1429 = vsel %vm1428, %v1425, %v1418
    %v1431 = vsub.f32 %v1389, %v1429
    %v1432 = vmul.f32 %v1431, 1.442695
    %v1433 = vpow.pop %v1432
    %v1435 = vrot.slane %v1433, 1
    %v1436 = vperm.slane %v1433, 0
    %v1437 = vperm.slane %v1435, 0
    %v1440 = vmul.f32 %v1436, %v1391
    %v1441 = vmul.f32 %v1437, %v1391
    %v1442 = vsel %vm1403, %v1440, 0.0
    %1443 = vadd.xlane.f32.xlu0 %v1442
    %v1444 = vpop.xlane.xlu0 %1443
    %v1445 = vsel %vm1403, %v1441, 0.0
    %1446 = vadd.xlane.f32.xlu0 %v1445
    %v1447 = vpop.xlane.xlu0 %1446
    %v1448 = vmul.f32 %v1444, %v1391
    %v1449 = vmul.f32 %v1447, %v1391
    %v1450 = vsel %vm1403, %v1448, 0.0
    %v1451 = vrot.slane %v1450, 4
    %v1452 = vadd.f32 %v1450, %v1451
    %v1453 = vrot.slane %v1452, 2
    %v1454 = vadd.f32 %v1452, %v1453
    %v1455 = vrot.slane %v1454, 1
    %v1456 = vadd.f32 %v1454, %v1455
    %v1457 = vsel %vm1403, %v1449, 0.0
    %v1458 = vrot.slane %v1457, 4
    %v1459 = vadd.f32 %v1457, %v1458
    %v1460 = vrot.slane %v1459, 2
    %v1461 = vadd.f32 %v1459, %v1460
    %v1462 = vrot.slane %v1461, 1
    %v1463 = vadd.f32 %v1461, %v1462
    %v1466 = vsel %vm1428, %v1463, %v1456
    %v1468 = vrcp.pop %v1466
    %v1469 = vmul.f32 %v1466, %v1468
    %v1470 = vsub.f32 1.0, %v1469
    %v1471 = vmul.f32 %v1468, %v1470
    %v1472 = vadd.f32 %v1468, %v1471
    %vm1473 = vweird.f32 %v1466
    %vm1474 = vweird.f32 %v1468
    %vm1475 = vmor %vm1473, %vm1474
    %v1476 = vsel %vm1475, %v1468, %v1472
    %v1477 = vand.u32 2147483647, %v1466
    %vm1478 = vcmp.eq.f32.partialorder %v1477, 8.507059e+37
    %v1479 = vand.u32 %v1466, 2147483648
    %v1480 = vor.u32 1.1754944e-38, %v1479
    %v1481 = vsel %vm1478, %v1480, %v1476
    %v1482 = vmul.f32 %v1433, %v1481
    %1483 = vst.msk [vmem:[#allocation2] sm:$0x3] %vm1403, %v1482
    // Predicated region
    $region90: #{_forward_impl.1} parent=1 // pred_check
      _
    $region91: #{_forward_impl.1} parent=1 // pred_check_branch
      %1485 = sbr.rel (0) target = $region93
    $region92: #{_forward_impl.1} parent=1 // pred_region
      %1487 = vsyncadd [#allocation3], 0
      %s1489 = sshll.u32 [#allocation2], 4
      %s1490 = int_to_ptr.vmem [resolvable:$true] %s1489
      %s1491 = sshll.u32 %s22, 4
      %s1492 = int_to_ptr.hbm [resolvable:$true] %s1491
      %1494 = dma.vmem_to_hbm [thread:$0]  %s1490, 32, %s1492, [#allocation3]
    $region93: #{_forward_impl.1} parent=1 // pred_fallthru
      _
    // Predicated region
    $region94: #{_forward_impl.1} parent=1 // pred_check
      _
    $region95: #{_forward_impl.1} parent=1 // pred_check_branch
      %1496 = sbr.rel (0) target = $region97
    $region96: #{_forward_impl.1} parent=1 // pred_region
      %1498 = dma.done [#allocation3], 32
    $region97: #{_forward_impl.1} parent=1 // pred_fallthru
      _
    %1499 = vsyncpa [#allocation3], 1

</llo_original>
